<compile_context>
chip_gen: v7x
topology: tpu7x:2x2x1
jax: 0.10.0
libtpu: 0.0.40
codegen_flags: <defaults>
</compile_context>

<pallas_src>
import jax
import jax.numpy as jnp
import numpy as np
from jax.experimental import pallas as pl
from jax.experimental.pallas import tpu as pltpu


# ------------------------------ kernel ------------------------------------- #

def _make_kernel(stride, TH, Wo, Wp_in, C, Cout):
    """Fused depthwise3x3+BN+ReLU -> 1x1+BN+ReLU for one (batch, row-tile) step.

    xt_ref  : (1, stride*stride, TH+halo, Wp_in, C) bf16   phase-split input rows
    dww_ref : (9, C)       f32   depthwise taps, lane-dense over channels
    dwsb_ref: (2, C)       f32   folded depthwise BN scale / bias
    pww_ref : (C, Cout)    bf16  pointwise weight (resident MXU operand)
    pwsb_ref: (2, Cout)    f32   folded pointwise BN scale / bias
    o_ref   : (1, TH, Wo, Cout) f32
    """
    s = stride

    def kernel(xt_ref, dww_ref, dwsb_ref, pww_ref, pwsb_ref, o_ref):
        acc = jnp.zeros((TH, Wp_in, C), jnp.float32)
        slabs = {}
        # Group the 9 taps by kw: partial sums are built at padded width and the
        # column shift is applied ONCE per kw with an XLU roll (no misaligned
        # slice -> no full-slab VMEM relayout copy).  Row/phase slabs are loaded
        # once and reused across kw (dict cache).
        for kw in range(3):
            pw, dw = kw % s, kw // s
            part = None
            for kh in range(3):
                ph, dh = kh % s, kh // s
                key = (ph * s + pw, dh)
                if key not in slabs:
                    # contiguous read; widen bf16 -> f32 on load (VALU math in f32,
                    # matters on v5e which has no bf16 VPU)
                    slabs[key] = xt_ref[0, key[0], dh:dh + TH, :, :].astype(jnp.float32)
                term = slabs[key] * dww_ref[kh * 3 + kw, :]
                part = term if part is None else part + term
            if dw:
                # shift by dw output columns; Wp_in is a multiple of 8 so the
                # sublane rotate is over a fully physical dimension.
                part = pltpu.roll(part, shift=Wp_in - dw, axis=1)
            acc = acc + part
        # Crop the kw halo columns once, then folded BN + ReLU.
        y = jnp.maximum(acc[:, :Wo, :] * dwsb_ref[0, :] + dwsb_ref[1, :], 0.0)
        # Pointwise 1x1 as a bf16 MXU matmul over (pixels, Cin), f32 accumulation.
        ym = y.reshape(TH * Wo, C).astype(jnp.bfloat16)
        out = jnp.dot(ym, pww_ref[...], preferred_element_type=jnp.float32)
        out = jnp.maximum(out * pwsb_ref[0, :] + pwsb_ref[1, :], 0.0)
        o_ref[0] = out.reshape(TH, Wo, Cout).astype(o_ref.dtype)

    return kernel


# ------------------------------ wrapper ------------------------------------- #

def _round_up(x, m):
    return (x + m - 1) // m * m


def _pick_row_tile(Ho, Wo, Wp_in, S2, C, Cout, budget_bytes=4 << 20):
    # Size the row tile so per-step blocks (bf16 input phases + f32 acc + f32 out)
    # stay a few MiB: plenty of pipeline steps and far below v7x's 64 MiB VMEM.
    in_row = S2 * Wp_in * C * 2
    acc_row = Wp_in * C * 4
    out_row = Wo * Cout * 4
    per_row = in_row + acc_row + out_row
    th = max(1, int(budget_bytes // max(per_row, 1)))
    th = min(th, Ho)
    if th >= 8:
        th = (th // 8) * 8          # keeps TH*Wo a sublane multiple
    return th


def depth_sep_conv(x, params, stride=1, eps=1e-5, row_tile=None, out_layout="NCHW"):
    """DepthSepConv forward. x: (N, C, H, W) f32 NCHW (PyTorch layout).

    Returns NCHW f32 by default (module parity).  Pass out_layout="NHWC" to keep
    the kernel's native layout and skip the trailing transpose when chaining blocks.
    """
    (dw_w, dw_b, g1, b1, m1, v1, pw_w, pw_b, g2, b2, m2, v2) = params
    N, C, H, W = x.shape
    Cout = pw_w.shape[0]
    s = int(stride)
    K = 3

    # Fold conv bias + inference BatchNorm into per-channel affines.
    s1 = g1 / jnp.sqrt(v1 + eps)
    o1 = b1 + s1 * (dw_b - m1)
    s2 = g2 / jnp.sqrt(v2 + eps)
    o2 = b2 + s2 * (pw_b - m2)

    dww = dw_w.reshape(C, 9).T.astype(jnp.float32)             # (9, C)
    dwsb = jnp.stack([s1, o1], axis=0).astype(jnp.float32)     # (2, C)
    pww = pw_w.reshape(Cout, C).T.astype(jnp.bfloat16)         # (C, Cout) MXU bf16
    pwsb = jnp.stack([s2, o2], axis=0).astype(jnp.float32)     # (2, Cout)

    Ho = (H + 2 - K) // s + 1
    Wo = (W + 2 - K) // s + 1
    halo = (K - 1) // s                 # extra phase-plane rows / cols per tile
    S2 = s * s

    Wp_in = _round_up(Wo + halo, 8)     # phase-plane width, sublane-aligned for roll
    if row_tile is None:
        TH = _pick_row_tile(Ho, Wo, Wp_in, S2, C, Cout)
    else:
        TH = max(1, min(int(row_tile), Ho))
    R = -(-Ho // TH)                    # ceil(Ho / TH)
    THin = TH + halo
    Hp_in = R * TH + halo               # phase-plane rows needed overall

    # --- XLA glue: NCHW->NHWC + zero pad + bf16 cast + stride-phase split +
    # --- row tiling with a +halo row overlap.  One fused gather that costs
    # --- ~(1 + halo/TH)x the input bytes (vs 9/stride^2 tap planes before).
    Hp_req = s * Hp_in
    Wp_req = s * Wp_in
    xpad = jnp.pad(jnp.transpose(x, (0, 2, 3, 1)),
                   ((0, 0), (1, Hp_req - H - 1), (1, Wp_req - W - 1), (0, 0)))
    xpad = xpad.astype(jnp.bfloat16)                            # bf16 HBM/DMA path
    # phase p = (h % s) * s + (w % s): xph[n, p, a, b, c] = xpad[n, s*a+ph, s*b+pw, c]
    xph = xpad.reshape(N, Hp_in, s, Wp_in, s, C)
    xph = jnp.transpose(xph, (0, 2, 4, 1, 3, 5)).reshape(N, S2, Hp_in, Wp_in, C)
    row_idx = jnp.arange(R)[:, None] * TH + jnp.arange(THin)[None, :]
    xt = jnp.take(xph, row_idx, axis=2)                         # (N, S2, R, THin, Wp_in, C)
    xt = jnp.moveaxis(xt, 2, 1).reshape(N * R, S2, THin, Wp_in, C)

    kernel = _make_kernel(s, TH, Wo, Wp_in, C, Cout)

    in_specs = [
        pl.BlockSpec((1, S2, THin, Wp_in, C), lambda n, r: (n * R + r, 0, 0, 0, 0)),
        pl.BlockSpec((9, C), lambda n, r: (0, 0)),
        pl.BlockSpec((2, C), lambda n, r: (0, 0)),
        pl.BlockSpec((C, Cout), lambda n, r: (0, 0)),   # resident pointwise weight
        pl.BlockSpec((2, Cout), lambda n, r: (0, 0)),
    ]
    out_spec = pl.BlockSpec((1, TH, Wo, Cout), lambda n, r: (n, r, 0, 0))
    out_shape = jax.ShapeDtypeStruct((N, R * TH, Wo, Cout), jnp.float32)

    flops = 2 * N * Ho * Wo * C * (9 + Cout)
    bytes_accessed = (xt.size * 2 + pww.size * 2
                      + (dww.size + dwsb.size + pwsb.size) * 4
                      + N * R * TH * Wo * Cout * 4)
    cost = pl.CostEstimate(flops=flops, transcendentals=0,
                           bytes_accessed=bytes_accessed)

    cp = pltpu.CompilerParams(
        # both grid axes independent -> megacore sharding even at N=1 (v7x)
        dimension_semantics=("parallel", "parallel"),
        # row-tiled blocks stay small; keep the scoped budget below v7x's 64 MiB
        vmem_limit_bytes=32 * 1024 * 1024,
    )

    out = pl.pallas_call(
        kernel,
        out_shape=out_shape,
        grid=(N, R),
        in_specs=in_specs,
        out_specs=out_spec,
        compiler_params=cp,
        cost_estimate=cost,
    )(xt, dww, dwsb, pww, pwsb)

    out = out[:, :Ho]                                           # crop row-tile padding
    if out_layout == "NHWC":
        return out
    return jnp.transpose(out, (0, 3, 1, 2))                     # NCHW for module parity


# --------------------------- pure-JAX reference ----------------------------- #

def _reference(x, params, stride=1, eps=1e-5):
    (dw_w, dw_b, g1, b1, m1, v1, pw_w, pw_b, g2, b2, m2, v2) = params
    C = x.shape[1]

    def bn(y, g, b, m, v):
        r = lambda a: a.reshape(1, -1, 1, 1)
        return r(g) * (y - r(m)) / jnp.sqrt(r(v) + eps) + r(b)

    y = jax.lax.conv_general_dilated(
        x, dw_w, (stride, stride), ((1, 1), (1, 1)),
        dimension_numbers=("NCHW", "OIHW", "NCHW"), feature_group_count=C)
    y = y + dw_b.reshape(1, -1, 1, 1)
    y = jnp.maximum(bn(y, g1, b1, m1, v1), 0.0)
    y = jax.lax.conv_general_dilated(
        y, pw_w, (1, 1), ((0, 0), (0, 0)),
        dimension_numbers=("NCHW", "OIHW", "NCHW"))
    y = y + pw_b.reshape(1, -1, 1, 1)
    return jnp.maximum(bn(y, g2, b2, m2, v2), 0.0)


# ---------------------------------- main ------------------------------------ #

if __name__ == "__main__":
    N, Cin, Cout, H, W = 2, 4, 8, 16, 16

    key = jax.random.PRNGKey(0)
    k = jax.random.split(key, 8)
    x = jax.random.normal(k[0], (N, Cin, H, W), jnp.float32)

    # nn.Conv2d(in_ch, in_ch, 3, stride, 1, groups=in_ch): weight (C,1,3,3), bias (C,)
    dw_w = jax.random.normal(k[1], (Cin, 1, 3, 3), jnp.float32) * 0.2
    dw_b = jax.random.normal(k[2], (Cin,), jnp.float32) * 0.1
    # BatchNorm2d(in_ch): deterministic synthetic running stats
    g1 = 1.0 + 0.1 * jnp.arange(Cin, dtype=jnp.float32)
    b1 = 0.05 * jnp.arange(Cin, dtype=jnp.float32)
    m1 = 0.02 * jnp.arange(Cin, dtype=jnp.float32)
    v1 = 1.0 + 0.03 * jnp.arange(Cin, dtype=jnp.float32)
    # nn.Conv2d(in_ch, out_ch, 1): weight (Cout,Cin,1,1), bias (Cout,)
    pw_w = jax.random.normal(k[3], (Cout, Cin, 1, 1), jnp.float32) * 0.3
    pw_b = jax.random.normal(k[4], (Cout,), jnp.float32) * 0.1
    # BatchNorm2d(out_ch)
    g2 = 1.0 + 0.05 * jnp.arange(Cout, dtype=jnp.float32)
    b2 = -0.02 * jnp.arange(Cout, dtype=jnp.float32)
    m2 = 0.01 * jnp.arange(Cout, dtype=jnp.float32)
    v2 = 1.0 + 0.02 * jnp.arange(Cout, dtype=jnp.float32)

    params = (dw_w, dw_b, g1, b1, m1, v1, pw_w, pw_b, g2, b2, m2, v2)

    # bf16 activations / pointwise weight (f32 accumulation) -> relaxed tolerance.
    # Also exercise the multi-row-tile path by forcing small row tiles.
    for stride, row_tile in ((1, None), (1, 8), (2, None), (2, 4)):
        out = jax.block_until_ready(
            depth_sep_conv(x, params, stride=stride, row_tile=row_tile))
        ref = jax.block_until_ready(_reference(x, params, stride=stride))
        assert out.shape == ref.shape, (stride, row_tile, out.shape, ref.shape)
        np.testing.assert_allclose(np.asarray(out), np.asarray(ref),
                                   rtol=5e-2, atol=5e-2)

    print("KERNEL_OK")
</pallas_src>

<mosaic_0001>
module attributes {stable_mosaic.version = 11 : i64} {
  func.func @kernel(%arg0: i32, %arg1: i32, %arg2: memref<1x1x18x24x4xbf16, #tpu.memory_space<vmem>>, %arg3: memref<9x4xf32, #tpu.memory_space<vmem>>, %arg4: memref<2x4xf32, #tpu.memory_space<vmem>>, %arg5: memref<4x8xbf16, #tpu.memory_space<vmem>>, %arg6: memref<2x8xf32, #tpu.memory_space<vmem>>, %arg7: memref<1x16x16x8xf32, #tpu.memory_space<vmem>>) attributes {dimension_semantics = [#tpu.dimension_semantics<parallel>, #tpu.dimension_semantics<parallel>], iteration_bounds = array<i64: 2, 1>, scalar_prefetch = 0 : i64, scratch_operands = 0 : i64, tpu.core_type = #tpu.core_type<tc>, window_params = [{transform_indices = @transform_0, window_bounds = array<i64: 1, 1, 18, 24, 4>}, {pipeline_mode = #tpu.pipeline_mode<synchronous>, transform_indices = @transform_1, window_bounds = array<i64: 9, 4>}, {pipeline_mode = #tpu.pipeline_mode<synchronous>, transform_indices = @transform_2, window_bounds = array<i64: 2, 4>}, {pipeline_mode = #tpu.pipeline_mode<synchronous>, transform_indices = @transform_3, window_bounds = array<i64: 4, 8>}, {pipeline_mode = #tpu.pipeline_mode<synchronous>, transform_indices = @transform_4, window_bounds = array<i64: 2, 8>}, {transform_indices = @transform_5, window_bounds = array<i64: 1, 16, 16, 8>}]} {
    %cst = arith.constant 0.000000e+00 : f32
    %0 = vector.broadcast %cst : f32 to vector<16x24x4xf32>
    %c0 = arith.constant 0 : index
    %c0_0 = arith.constant 0 : index
    %c0_1 = arith.constant 0 : index
    %c0_2 = arith.constant 0 : index
    %c0_3 = arith.constant 0 : index
    %1 = vector.load %arg2[%c0, %c0_0, %c0_1, %c0_2, %c0_3] : memref<1x1x18x24x4xbf16, #tpu.memory_space<vmem>>, vector<1x1x16x24x4xbf16>
    %2 = vector.shape_cast %1 : vector<1x1x16x24x4xbf16> to vector<16x24x4xbf16>
    %3 = arith.extf %2 : vector<16x24x4xbf16> to vector<16x24x4xf32>
    %c0_4 = arith.constant 0 : index
    %c0_5 = arith.constant 0 : index
    %4 = vector.load %arg3[%c0_4, %c0_5] : memref<9x4xf32, #tpu.memory_space<vmem>>, vector<1x4xf32>
    %5 = vector.shape_cast %4 : vector<1x4xf32> to vector<4xf32>
    %6 = vector.shape_cast %5 : vector<4xf32> to vector<1x1x4xf32>
    %7 = vector.broadcast %6 : vector<1x1x4xf32> to vector<16x24x4xf32>
    %8 = arith.mulf %3, %7 : vector<16x24x4xf32>
    %c0_6 = arith.constant 0 : index
    %c0_7 = arith.constant 0 : index
    %c1 = arith.constant 1 : index
    %c0_8 = arith.constant 0 : index
    %c0_9 = arith.constant 0 : index
    %9 = vector.load %arg2[%c0_6, %c0_7, %c1, %c0_8, %c0_9] : memref<1x1x18x24x4xbf16, #tpu.memory_space<vmem>>, vector<1x1x16x24x4xbf16>
    %10 = vector.shape_cast %9 : vector<1x1x16x24x4xbf16> to vector<16x24x4xbf16>
    %11 = arith.extf %10 : vector<16x24x4xbf16> to vector<16x24x4xf32>
    %c3 = arith.constant 3 : index
    %c0_10 = arith.constant 0 : index
    %12 = vector.load %arg3[%c3, %c0_10] : memref<9x4xf32, #tpu.memory_space<vmem>>, vector<1x4xf32>
    %13 = vector.shape_cast %12 : vector<1x4xf32> to vector<4xf32>
    %14 = vector.shape_cast %13 : vector<4xf32> to vector<1x1x4xf32>
    %15 = vector.broadcast %14 : vector<1x1x4xf32> to vector<16x24x4xf32>
    %16 = arith.mulf %11, %15 : vector<16x24x4xf32>
    %17 = arith.addf %8, %16 : vector<16x24x4xf32>
    %c0_11 = arith.constant 0 : index
    %c0_12 = arith.constant 0 : index
    %c2 = arith.constant 2 : index
    %c0_13 = arith.constant 0 : index
    %c0_14 = arith.constant 0 : index
    %18 = vector.load %arg2[%c0_11, %c0_12, %c2, %c0_13, %c0_14] : memref<1x1x18x24x4xbf16, #tpu.memory_space<vmem>>, vector<1x1x16x24x4xbf16>
    %19 = vector.shape_cast %18 : vector<1x1x16x24x4xbf16> to vector<16x24x4xbf16>
    %20 = arith.extf %19 : vector<16x24x4xbf16> to vector<16x24x4xf32>
    %c6 = arith.constant 6 : index
    %c0_15 = arith.constant 0 : index
    %21 = vector.load %arg3[%c6, %c0_15] : memref<9x4xf32, #tpu.memory_space<vmem>>, vector<1x4xf32>
    %22 = vector.shape_cast %21 : vector<1x4xf32> to vector<4xf32>
    %23 = vector.shape_cast %22 : vector<4xf32> to vector<1x1x4xf32>
    %24 = vector.broadcast %23 : vector<1x1x4xf32> to vector<16x24x4xf32>
    %25 = arith.mulf %20, %24 : vector<16x24x4xf32>
    %26 = arith.addf %17, %25 : vector<16x24x4xf32>
    %27 = arith.addf %0, %26 : vector<16x24x4xf32>
    %c1_16 = arith.constant 1 : index
    %c0_17 = arith.constant 0 : index
    %28 = vector.load %arg3[%c1_16, %c0_17] : memref<9x4xf32, #tpu.memory_space<vmem>>, vector<1x4xf32>
    %29 = vector.shape_cast %28 : vector<1x4xf32> to vector<4xf32>
    %30 = vector.shape_cast %29 : vector<4xf32> to vector<1x1x4xf32>
    %31 = vector.broadcast %30 : vector<1x1x4xf32> to vector<16x24x4xf32>
    %32 = arith.mulf %3, %31 : vector<16x24x4xf32>
    %c4 = arith.constant 4 : index
    %c0_18 = arith.constant 0 : index
    %33 = vector.load %arg3[%c4, %c0_18] : memref<9x4xf32, #tpu.memory_space<vmem>>, vector<1x4xf32>
    %34 = vector.shape_cast %33 : vector<1x4xf32> to vector<4xf32>
    %35 = vector.shape_cast %34 : vector<4xf32> to vector<1x1x4xf32>
    %36 = vector.broadcast %35 : vector<1x1x4xf32> to vector<16x24x4xf32>
    %37 = arith.mulf %11, %36 : vector<16x24x4xf32>
    %38 = arith.addf %32, %37 : vector<16x24x4xf32>
    %c7 = arith.constant 7 : index
    %c0_19 = arith.constant 0 : index
    %39 = vector.load %arg3[%c7, %c0_19] : memref<9x4xf32, #tpu.memory_space<vmem>>, vector<1x4xf32>
    %40 = vector.shape_cast %39 : vector<1x4xf32> to vector<4xf32>
    %41 = vector.shape_cast %40 : vector<4xf32> to vector<1x1x4xf32>
    %42 = vector.broadcast %41 : vector<1x1x4xf32> to vector<16x24x4xf32>
    %43 = arith.mulf %20, %42 : vector<16x24x4xf32>
    %44 = arith.addf %38, %43 : vector<16x24x4xf32>
    %c23_i32 = arith.constant 23 : i32
    %45 = tpu.dynamic_rotate %44 by %c23_i32 dim 1 : vector<16x24x4xf32>, i32 -> vector<16x24x4xf32>
    %46 = arith.addf %27, %45 : vector<16x24x4xf32>
    %c2_20 = arith.constant 2 : index
    %c0_21 = arith.constant 0 : index
    %47 = vector.load %arg3[%c2_20, %c0_21] : memref<9x4xf32, #tpu.memory_space<vmem>>, vector<1x4xf32>
    %48 = vector.shape_cast %47 : vector<1x4xf32> to vector<4xf32>
    %49 = vector.shape_cast %48 : vector<4xf32> to vector<1x1x4xf32>
    %50 = vector.broadcast %49 : vector<1x1x4xf32> to vector<16x24x4xf32>
    %51 = arith.mulf %3, %50 : vector<16x24x4xf32>
    %c5 = arith.constant 5 : index
    %c0_22 = arith.constant 0 : index
    %52 = vector.load %arg3[%c5, %c0_22] : memref<9x4xf32, #tpu.memory_space<vmem>>, vector<1x4xf32>
    %53 = vector.shape_cast %52 : vector<1x4xf32> to vector<4xf32>
    %54 = vector.shape_cast %53 : vector<4xf32> to vector<1x1x4xf32>
    %55 = vector.broadcast %54 : vector<1x1x4xf32> to vector<16x24x4xf32>
    %56 = arith.mulf %11, %55 : vector<16x24x4xf32>
    %57 = arith.addf %51, %56 : vector<16x24x4xf32>
    %c8 = arith.constant 8 : index
    %c0_23 = arith.constant 0 : index
    %58 = vector.load %arg3[%c8, %c0_23] : memref<9x4xf32, #tpu.memory_space<vmem>>, vector<1x4xf32>
    %59 = vector.shape_cast %58 : vector<1x4xf32> to vector<4xf32>
    %60 = vector.shape_cast %59 : vector<4xf32> to vector<1x1x4xf32>
    %61 = vector.broadcast %60 : vector<1x1x4xf32> to vector<16x24x4xf32>
    %62 = arith.mulf %20, %61 : vector<16x24x4xf32>
    %63 = arith.addf %57, %62 : vector<16x24x4xf32>
    %c22_i32 = arith.constant 22 : i32
    %64 = tpu.dynamic_rotate %63 by %c22_i32 dim 1 : vector<16x24x4xf32>, i32 -> vector<16x24x4xf32>
    %65 = arith.addf %46, %64 : vector<16x24x4xf32>
    %66 = vector.extract_strided_slice %65 {offsets = [0, 0, 0], sizes = [16, 16, 4], strides = [1, 1, 1]} : vector<16x24x4xf32> to vector<16x16x4xf32>
    %c0_24 = arith.constant 0 : index
    %c0_25 = arith.constant 0 : index
    %67 = vector.load %arg4[%c0_24, %c0_25] : memref<2x4xf32, #tpu.memory_space<vmem>>, vector<1x4xf32>
    %68 = vector.shape_cast %67 : vector<1x4xf32> to vector<4xf32>
    %69 = vector.shape_cast %68 : vector<4xf32> to vector<1x1x4xf32>
    %70 = vector.broadcast %69 : vector<1x1x4xf32> to vector<16x16x4xf32>
    %71 = arith.mulf %66, %70 : vector<16x16x4xf32>
    %c1_26 = arith.constant 1 : index
    %c0_27 = arith.constant 0 : index
    %72 = vector.load %arg4[%c1_26, %c0_27] : memref<2x4xf32, #tpu.memory_space<vmem>>, vector<1x4xf32>
    %73 = vector.shape_cast %72 : vector<1x4xf32> to vector<4xf32>
    %74 = vector.shape_cast %73 : vector<4xf32> to vector<1x1x4xf32>
    %75 = vector.broadcast %74 : vector<1x1x4xf32> to vector<16x16x4xf32>
    %76 = arith.addf %71, %75 : vector<16x16x4xf32>
    %cst_28 = arith.constant 0.000000e+00 : f32
    %77 = vector.broadcast %cst_28 : f32 to vector<16x16x4xf32>
    %78 = arith.maximumf %76, %77 : vector<16x16x4xf32>
    %79 = vector.shape_cast %78 : vector<16x16x4xf32> to vector<256x4xf32>
    %80 = arith.truncf %79 : vector<256x4xf32> to vector<256x4xbf16>
    %c0_29 = arith.constant 0 : index
    %c0_30 = arith.constant 0 : index
    %81 = vector.load %arg5[%c0_29, %c0_30] : memref<4x8xbf16, #tpu.memory_space<vmem>>, vector<4x8xbf16>
    %cst_31 = arith.constant dense<0.000000e+00> : vector<256x8xf32>
    %82 = tpu.matmul %80, %81, %cst_31 {dimension_numbers = #tpu.dot_dimension_numbers<[1], [0], [0], [1], [0, 0, 1, 1], [], []>} : vector<256x4xbf16>, vector<4x8xbf16>, vector<256x8xf32> -> vector<256x8xf32>
    %c0_32 = arith.constant 0 : index
    %c0_33 = arith.constant 0 : index
    %83 = vector.load %arg6[%c0_32, %c0_33] : memref<2x8xf32, #tpu.memory_space<vmem>>, vector<1x8xf32>
    %84 = vector.shape_cast %83 : vector<1x8xf32> to vector<8xf32>
    %85 = vector.shape_cast %84 : vector<8xf32> to vector<1x8xf32>
    %86 = vector.broadcast %85 : vector<1x8xf32> to vector<256x8xf32>
    %87 = arith.mulf %82, %86 : vector<256x8xf32>
    %c1_34 = arith.constant 1 : index
    %c0_35 = arith.constant 0 : index
    %88 = vector.load %arg6[%c1_34, %c0_35] : memref<2x8xf32, #tpu.memory_space<vmem>>, vector<1x8xf32>
    %89 = vector.shape_cast %88 : vector<1x8xf32> to vector<8xf32>
    %90 = vector.shape_cast %89 : vector<8xf32> to vector<1x8xf32>
    %91 = vector.broadcast %90 : vector<1x8xf32> to vector<256x8xf32>
    %92 = arith.addf %87, %91 : vector<256x8xf32>
    %cst_36 = arith.constant 0.000000e+00 : f32
    %93 = vector.broadcast %cst_36 : f32 to vector<256x8xf32>
    %94 = arith.maximumf %92, %93 : vector<256x8xf32>
    %95 = vector.shape_cast %94 : vector<256x8xf32> to vector<16x16x8xf32>
    %c0_37 = arith.constant 0 : index
    %c0_38 = arith.constant 0 : index
    %c0_39 = arith.constant 0 : index
    %c0_40 = arith.constant 0 : index
    %96 = vector.load %arg7[%c0_37, %c0_38, %c0_39, %c0_40] : memref<1x16x16x8xf32, #tpu.memory_space<vmem>>, vector<1x16x16x8xf32>
    %97 = vector.shape_cast %96 : vector<1x16x16x8xf32> to vector<16x16x8xf32>
    %98 = vector.shape_cast %95 : vector<16x16x8xf32> to vector<1x16x16x8xf32>
    tpu.vector_store %arg7[%c0_37, %c0_38, %c0_39, %c0_40], %98 {strides = array<i32>} : memref<1x16x16x8xf32, #tpu.memory_space<vmem>>, vector<1x16x16x8xf32>,
    return
  }
  func.func @transform_0(%arg0: i32, %arg1: i32) -> (i32, i32, i32, i32, i32) {
    %c1_i32 = arith.constant 1 : i32
    %0 = arith.muli %arg0, %c1_i32 : i32
    %1 = arith.addi %0, %arg1 : i32
    %c0_i32 = arith.constant 0 : i32
    %c0_i32_0 = arith.constant 0 : i32
    %c0_i32_1 = arith.constant 0 : i32
    %c0_i32_2 = arith.constant 0 : i32
    %c0_i32_3 = arith.constant 0 : i32
    return %1, %c0_i32, %c0_i32_0, %c0_i32_1, %c0_i32_2 : i32, i32, i32, i32, i32
  }
  func.func @transform_1(%arg0: i32, %arg1: i32) -> (i32, i32) {
    %c0_i32 = arith.constant 0 : i32
    %c0_i32_0 = arith.constant 0 : i32
    %c0_i32_1 = arith.constant 0 : i32
    return %c0_i32, %c0_i32_0 : i32, i32
  }
  func.func @transform_2(%arg0: i32, %arg1: i32) -> (i32, i32) {
    %c0_i32 = arith.constant 0 : i32
    %c0_i32_0 = arith.constant 0 : i32
    %c0_i32_1 = arith.constant 0 : i32
    return %c0_i32, %c0_i32_0 : i32, i32
  }
  func.func @transform_3(%arg0: i32, %arg1: i32) -> (i32, i32) {
    %c0_i32 = arith.constant 0 : i32
    %c0_i32_0 = arith.constant 0 : i32
    %c0_i32_1 = arith.constant 0 : i32
    return %c0_i32, %c0_i32_0 : i32, i32
  }
  func.func @transform_4(%arg0: i32, %arg1: i32) -> (i32, i32) {
    %c0_i32 = arith.constant 0 : i32
    %c0_i32_0 = arith.constant 0 : i32
    %c0_i32_1 = arith.constant 0 : i32
    return %c0_i32, %c0_i32_0 : i32, i32
  }
  func.func @transform_5(%arg0: i32, %arg1: i32) -> (i32, i32, i32, i32) {
    %c0_i32 = arith.constant 0 : i32
    %c0_i32_0 = arith.constant 0 : i32
    %c0_i32_1 = arith.constant 0 : i32
    return %arg0, %arg1, %c0_i32, %c0_i32_0 : i32, i32, i32, i32
  }
}

</mosaic_0001>

<llo_original>
// kernel: tpu_custom_call.1
$region0: #{tpu_custom_call.1}
  #allocation0 [shape = 'u32[]', space=smem, size = 0x4, offset = 0x4, fixed_abs, tag = 'smem constant byte address 0x4 - core index']
  #allocation1 [shape = 'u32[144,128]{1,0:T(1,128)}', space=vmem, size = 0x12000, scoped, tag = 'internal scratch']
  %s0 = inlined_call_operand.vmem [shape: bf16[2,1,18,24,4], index: 0, kind: input, shape index: {}]
  %s1 = inlined_call_operand.vmem [shape: f32[9,4], index: 1, kind: input, shape index: {}]
  %s2 = inlined_call_operand.vmem [shape: f32[2,4], index: 2, kind: input, shape index: {}]
  %s3 = inlined_call_operand.vmem [shape: bf16[4,8], index: 3, kind: input, shape index: {}]
  %s4 = inlined_call_operand.vmem [shape: f32[2,8], index: 4, kind: input, shape index: {}]
  %s5 = inlined_call_operand.vmem [shape: f32[2,16,16,8], index: 5, kind: output, shape index: {}]
  %s6 = sld [smem:[#allocation0]]
  $region53: #{tpu_custom_call.1} parent=0
    _
  %s8 = ssub.s32 1, %s6
  %s9 = scalar_select 0, %s8, %s6
  loop: start=0, step=1, limit=4
  $region2: #{tpu_custom_call.1} parent=0 // loop_pre_header
    _
  $region3: #{tpu_custom_call.1} parent=0 // loop_header
    %s11 = sphi 0, %s15
    %p12 = scmp.ge.s32.totalorder %s11, 4
    %s18 = sphi 0, %s30
    %s19 = sphi 0, %s26
    %s20 = sphi 0, %s18
    %s21 = sphi 0, %s19
    %s22 = sphi 0, %s20
    %s23 = sphi 0, %s21
    %s35 = sphi 0, %s37
    %s38 = sphi 0, %s35
    %s39 = sphi 0, %s38
    %s55 = sphi 0, %s39
    %s59 = sphi 0, %s59
    %s61 = sphi 0, %s59
    %s62 = sphi 0, %s61
    %s76 = sphi 0, %s62
    %s80 = sphi 0, %s80
    %s82 = sphi 0, %s80
    %s83 = sphi 0, %s82
    %s97 = sphi 0, %s83
    %s101 = sphi 0, %s101
    %s103 = sphi 0, %s101
    %s104 = sphi 0, %s103
    %s118 = sphi 0, %s104
    %s122 = sphi 0, %s122
    %s124 = sphi 0, %s122
    %s125 = sphi 0, %s124
    %s139 = sphi 0, %s125
    %s147 = sphi 0, %s149
    %s150 = sphi 0, %s147
    %s151 = sphi 0, %s150
    %s167 = sphi 0, %s151
  $region4: #{tpu_custom_call.1} parent=0 // loop_header_branch
    %14 = sbr.rel (%p12) target = $region8
  $region5: #{tpu_custom_call.1} parent=0 // loop_body
    %s16 = ssub.s32 %s11, 1
    %s17 = ssub.s32 %s11, 2
    %s24 = sadd.s32 1, %s19
    %p25 = scmp.ge.s32.totalorder %s24, 1
    %s26 = scalar_select %p25, 0, %s24
    %s27 = sadd.s32 1, %s18
    %s28 = scalar_select %p25, %s27, %s18
    %p29 = scmp.ge.s32.totalorder %s28, 2
    %s30 = scalar_select %p29, 0, %s28
    %s31 = sadd.s32 %s18, %s19
    %s32 = sadd.s32 %s30, %s26
    %s33 = ssub.s32 %s31, %s32
    %p34 = scmp.eq.s32.totalorder %s33, 0
    %s36 = sadd.s32 %s35, 1
    %s37 = scalar_select %p34, %s35, %s36
    %p40 = pneg %p34
    %p41 = scmp.eq.s32.totalorder %s11, 1
    %p42 = por %p40, %p41
    %p43 = scmp.ne.s32.totalorder %s35, %s38
    %p44 = scmp.eq.s32.totalorder %s11, 0
    %p45 = por %p43, %p44
    %p46 = scmp.ne.s32.totalorder %s35, %s38
    %p47 = scmp.eq.s32.totalorder %s16, 1
    %p48 = por %p46, %p47
    %p49 = scmp.ne.s32.totalorder %s38, %s39
    %p50 = scmp.eq.s32.totalorder %s16, 0
    %p51 = por %p49, %p50
    %p52 = scmp.ne.s32.totalorder %s38, %s39
    %p53 = scmp.eq.s32.totalorder %s17, 1
    %p54 = por %p52, %p53
    %p56 = scmp.ne.s32.totalorder %s39, %s55
    %p57 = scmp.eq.s32.totalorder %s17, 0
    %p58 = por %p56, %p57
    %s60 = sadd.s32 %s59, 1
    %p63 = scmp.eq.s32.totalorder %s11, 1
    %p64 = scmp.ne.s32.totalorder %s59, %s61
    %p65 = scmp.eq.s32.totalorder %s11, 0
    %p66 = por %p64, %p65
    %p67 = scmp.ne.s32.totalorder %s59, %s61
    %p68 = scmp.eq.s32.totalorder %s16, 1
    %p69 = por %p67, %p68
    %p70 = scmp.ne.s32.totalorder %s61, %s62
    %p71 = scmp.eq.s32.totalorder %s16, 0
    %p72 = por %p70, %p71
    %p73 = scmp.ne.s32.totalorder %s61, %s62
    %p74 = scmp.eq.s32.totalorder %s17, 1
    %p75 = por %p73, %p74
    %p77 = scmp.ne.s32.totalorder %s62, %s76
    %p78 = scmp.eq.s32.totalorder %s17, 0
    %p79 = por %p77, %p78
    %s81 = sadd.s32 %s80, 1
    %p84 = scmp.eq.s32.totalorder %s11, 1
    %p85 = scmp.ne.s32.totalorder %s80, %s82
    %p86 = scmp.eq.s32.totalorder %s11, 0
    %p87 = por %p85, %p86
    %p88 = scmp.ne.s32.totalorder %s80, %s82
    %p89 = scmp.eq.s32.totalorder %s16, 1
    %p90 = por %p88, %p89
    %p91 = scmp.ne.s32.totalorder %s82, %s83
    %p92 = scmp.eq.s32.totalorder %s16, 0
    %p93 = por %p91, %p92
    %p94 = scmp.ne.s32.totalorder %s82, %s83
    %p95 = scmp.eq.s32.totalorder %s17, 1
    %p96 = por %p94, %p95
    %p98 = scmp.ne.s32.totalorder %s83, %s97
    %p99 = scmp.eq.s32.totalorder %s17, 0
    %p100 = por %p98, %p99
    %s102 = sadd.s32 %s101, 1
    %p105 = scmp.eq.s32.totalorder %s11, 1
    %p106 = scmp.ne.s32.totalorder %s101, %s103
    %p107 = scmp.eq.s32.totalorder %s11, 0
    %p108 = por %p106, %p107
    %p109 = scmp.ne.s32.totalorder %s101, %s103
    %p110 = scmp.eq.s32.totalorder %s16, 1
    %p111 = por %p109, %p110
    %p112 = scmp.ne.s32.totalorder %s103, %s104
    %p113 = scmp.eq.s32.totalorder %s16, 0
    %p114 = por %p112, %p113
    %p115 = scmp.ne.s32.totalorder %s103, %s104
    %p116 = scmp.eq.s32.totalorder %s17, 1
    %p117 = por %p115, %p116
    %p119 = scmp.ne.s32.totalorder %s104, %s118
    %p120 = scmp.eq.s32.totalorder %s17, 0
    %p121 = por %p119, %p120
    %s123 = sadd.s32 %s122, 1
    %p126 = scmp.eq.s32.totalorder %s11, 1
    %p127 = scmp.ne.s32.totalorder %s122, %s124
    %p128 = scmp.eq.s32.totalorder %s11, 0
    %p129 = por %p127, %p128
    %p130 = scmp.ne.s32.totalorder %s122, %s124
    %p131 = scmp.eq.s32.totalorder %s16, 1
    %p132 = por %p130, %p131
    %p133 = scmp.ne.s32.totalorder %s124, %s125
    %p134 = scmp.eq.s32.totalorder %s16, 0
    %p135 = por %p133, %p134
    %p136 = scmp.ne.s32.totalorder %s124, %s125
    %p137 = scmp.eq.s32.totalorder %s17, 1
    %p138 = por %p136, %p137
    %p140 = scmp.ne.s32.totalorder %s125, %s139
    %p141 = scmp.eq.s32.totalorder %s17, 0
    %p142 = por %p140, %p141
    %s143 = ssub.s32 %s18, %s30
    %s144 = ssub.s32 %s19, %s26
    %s145 = sor.u32 %s143, %s144
    %p146 = scmp.eq.s32.totalorder %s145, 0
    %s148 = sadd.s32 %s147, 1
    %s149 = scalar_select %p146, %s147, %s148
    %p152 = pneg %p146
    %p153 = scmp.eq.s32.totalorder %s11, 1
    %p154 = por %p152, %p153
    %p155 = scmp.ne.s32.totalorder %s147, %s150
    %p156 = scmp.eq.s32.totalorder %s11, 0
    %p157 = por %p155, %p156
    %p158 = scmp.ne.s32.totalorder %s147, %s150
    %p159 = scmp.eq.s32.totalorder %s16, 1
    %p160 = por %p158, %p159
    %p161 = scmp.ne.s32.totalorder %s150, %s151
    %p162 = scmp.eq.s32.totalorder %s16, 0
    %p163 = por %p161, %p162
    %p164 = scmp.ne.s32.totalorder %s150, %s151
    %p165 = scmp.eq.s32.totalorder %s17, 1
    %p166 = por %p164, %p165
    %p168 = scmp.ne.s32.totalorder %s151, %s167
    %p169 = scmp.eq.s32.totalorder %s17, 0
    %p170 = por %p168, %p169
    %p171 = scmp.le.s32.totalorder 1, %s11
    %p172 = scmp.lt.s32.totalorder %s11, 3
    %p173 = pnand %p171, %p172
    %p174 = pneg %p173
    // Predicated region
    $region9: #{tpu_custom_call.1} parent=5 // pred_check
      _
    $region10: #{tpu_custom_call.1} parent=5 // pred_check_branch
      %176 = sbr.rel (%p173) target = $region12
    $region11: #{tpu_custom_call.1} parent=5 // pred_region
      %s177 = ssub.s32 %s11, 1
      // Predicated region
      $region13: #{tpu_custom_call.1} parent=11 // pred_check
        %p178 = pneg %p72
      $region14: #{tpu_custom_call.1} parent=11 // pred_check_branch
        %180 = sbr.rel (%p178) target = $region16
      $region15: #{tpu_custom_call.1} parent=11 // pred_region
        _
      $region16: #{tpu_custom_call.1} parent=11 // pred_fallthru
        _
      // Predicated region
      $region17: #{tpu_custom_call.1} parent=11 // pred_check
        %p181 = pneg %p93
      $region18: #{tpu_custom_call.1} parent=11 // pred_check_branch
        %183 = sbr.rel (%p181) target = $region20
      $region19: #{tpu_custom_call.1} parent=11 // pred_region
        _
      $region20: #{tpu_custom_call.1} parent=11 // pred_fallthru
        _
      // Predicated region
      $region21: #{tpu_custom_call.1} parent=11 // pred_check
        %p184 = pneg %p114
      $region22: #{tpu_custom_call.1} parent=11 // pred_check_branch
        %186 = sbr.rel (%p184) target = $region24
      $region23: #{tpu_custom_call.1} parent=11 // pred_region
        _
      $region24: #{tpu_custom_call.1} parent=11 // pred_fallthru
        _
      // Predicated region
      $region25: #{tpu_custom_call.1} parent=11 // pred_check
        %p187 = pneg %p135
      $region26: #{tpu_custom_call.1} parent=11 // pred_check_branch
        %189 = sbr.rel (%p187) target = $region28
      $region27: #{tpu_custom_call.1} parent=11 // pred_region
        _
      $region28: #{tpu_custom_call.1} parent=11 // pred_fallthru
        _
    $region12: #{tpu_custom_call.1} parent=5 // pred_fallthru
      _
    %p190 = scmp.lt.s32.totalorder %s11, 2
    // Predicated region
    $region29: #{tpu_custom_call.1} parent=5 // pred_check
      %p191 = pneg %p190
    $region30: #{tpu_custom_call.1} parent=5 // pred_check_branch
      %193 = sbr.rel (%p191) target = $region32
    $region31: #{tpu_custom_call.1} parent=5 // pred_region
      // Predicated region
      $region33: #{tpu_custom_call.1} parent=31 // pred_check
        %p194 = pneg %p45
      $region34: #{tpu_custom_call.1} parent=31 // pred_check_branch
        %196 = sbr.rel (%p194) target = $region36
      $region35: #{tpu_custom_call.1} parent=31 // pred_region
        %s197 = sadd.s32 %s18, %s19
        %p198 = scmp.lt.s32.totalorder %s197, 1
        %s199 = scalar_select %p198, %s197, 1
        %s200 = smul.addr %s199, 54
        %s201 = smul.addr %s200, 4
        %s202 = scalar_lea.vmem %s0, %s201
        %s203 = sadd.s32 %s18, %s19
      $region36: #{tpu_custom_call.1} parent=31 // pred_fallthru
        _
    $region32: #{tpu_custom_call.1} parent=5 // pred_fallthru
      _
    %p204 = scmp.le.s32.totalorder 1, %s11
    %p205 = scmp.lt.s32.totalorder %s11, 3
    %p206 = pnand %p204, %p205
    %p207 = pneg %p206
    // Predicated region
    $region37: #{tpu_custom_call.1} parent=5 // pred_check
      _
    $region38: #{tpu_custom_call.1} parent=5 // pred_check_branch
      %209 = sbr.rel (%p206) target = $region40
    $region39: #{tpu_custom_call.1} parent=5 // pred_region
      %s210 = ssub.s32 %s11, 1
      %s211 = sadd.s32 %s20, %s21
      %p212 = scmp.lt.s32.totalorder %s211, 1
      %s213 = scalar_select %p212, %s211, 1
      %s214 = smul.addr %s213, 54
      %s215 = smul.addr %s214, 4
      %s216 = scalar_lea.vmem %s0, %s215
      %p217 = pneg %p51
      %p218 = pneg %p48
      %p219 = pneg %p72
      %p220 = pneg %p69
      %p221 = pneg %p93
      %p222 = pneg %p90
      %p223 = pneg %p114
      %p224 = pneg %p111
      %p225 = pneg %p135
      %p226 = pneg %p132
      %p227 = pneg %p163
      %p228 = pneg %p160
      %s229 = smul.u32 16, %s21
      %p230 = scmp.lt.s32.totalorder %s20, 1
      %s231 = scalar_select %p230, %s20, 1
      %p232 = scmp.lt.s32.totalorder %s229, 15
      %s233 = scalar_select %p232, %s229, 15
      %s234 = smul.addr %s233, 2
      %s235 = smul.addr %s231, 32
      %s236 = sadd.s32 %s234, %s235
      %s237 = smul.addr %s236, 8
      %s238 = scalar_lea.vmem %s5, %s237
      %s239 = sadd.s32 %s20, %s21
      %p240 = scmp.lt.s32.totalorder %s239, 1
      %s241 = scalar_select %p240, %s239, 1
      %s242 = smul.addr %s241, 54
      %s243 = smul.addr %s242, 4
      %s244 = scalar_lea.vmem %s0, %s243
      %s245 = sadd.s32 %s20, %s21
      %s246 = smul.u32 16, %s21
      %p247 = scmp.lt.s32.totalorder %s20, 1
      %s248 = scalar_select %p247, %s20, 1
      %p249 = scmp.lt.s32.totalorder %s246, 15
      %s250 = scalar_select %p249, %s246, 15
      %s251 = smul.addr %s250, 2
      %s252 = smul.addr %s248, 32
      %s253 = sadd.s32 %s251, %s252
      %s254 = smul.addr %s253, 8
      %s255 = scalar_lea.vmem %s5, %s254
      %s256 = smul.u32 16, %s21
      %v258 = vld [vmem:[%s244] sm:$0xf]
      %v259 = vld [vmem:[%s244 + $0x4] sm:$0xf]
      %v260 = vld [vmem:[%s244 + $0x8] sm:$0xf]
      %v261 = vld [vmem:[%s244 + $0xc] sm:$0xf]
      %v262 = vld [vmem:[%s244 + $0x10] sm:$0xf]
      %v263 = vld [vmem:[%s244 + $0x14] sm:$0xf]
      %v264 = vld [vmem:[%s244 + $0x18] sm:$0xf]
      %v265 = vld [vmem:[%s244 + $0x1c] sm:$0xf]
      %v266 = vld [vmem:[%s244 + $0x20] sm:$0xf]
      %v267 = vld [vmem:[%s244 + $0x24] sm:$0xf]
      %v268 = vld [vmem:[%s244 + $0x28] sm:$0xf]
      %v269 = vld [vmem:[%s244 + $0x2c] sm:$0xf]
      %v270 = vld [vmem:[%s244 + $0x30] sm:$0xf]
      %v271 = vld [vmem:[%s244 + $0x34] sm:$0xf]
      %v272 = vld [vmem:[%s244 + $0x38] sm:$0xf]
      %v273 = vld [vmem:[%s244 + $0x3c] sm:$0xf]
      %v274 = vld [vmem:[%s244 + $0x40] sm:$0xf]
      %v275 = vld [vmem:[%s244 + $0x44] sm:$0xf]
      %v276 = vld [vmem:[%s244 + $0x48] sm:$0xf]
      %v277 = vld [vmem:[%s244 + $0x4c] sm:$0xf]
      %v278 = vld [vmem:[%s244 + $0x50] sm:$0xf]
      %v279 = vld [vmem:[%s244 + $0x54] sm:$0xf]
      %v280 = vld [vmem:[%s244 + $0x58] sm:$0xf]
      %v281 = vld [vmem:[%s244 + $0x5c] sm:$0xf]
      %v282 = vld [vmem:[%s244 + $0x60] sm:$0xf]
      %v283 = vld [vmem:[%s244 + $0x64] sm:$0xf]
      %v284 = vld [vmem:[%s244 + $0x68] sm:$0xf]
      %v285 = vld [vmem:[%s244 + $0x6c] sm:$0xf]
      %v286 = vld [vmem:[%s244 + $0x70] sm:$0xf]
      %v287 = vld [vmem:[%s244 + $0x74] sm:$0xf]
      %v288 = vld [vmem:[%s244 + $0x78] sm:$0xf]
      %v289 = vld [vmem:[%s244 + $0x7c] sm:$0xf]
      %v290 = vld [vmem:[%s244 + $0x80] sm:$0xf]
      %v291 = vld [vmem:[%s244 + $0x84] sm:$0xf]
      %v292 = vld [vmem:[%s244 + $0x88] sm:$0xf]
      %v293 = vld [vmem:[%s244 + $0x8c] sm:$0xf]
      %v294 = vld [vmem:[%s244 + $0x90] sm:$0xf]
      %v295 = vld [vmem:[%s244 + $0x94] sm:$0xf]
      %v296 = vld [vmem:[%s244 + $0x98] sm:$0xf]
      %v297 = vld [vmem:[%s244 + $0x9c] sm:$0xf]
      %v298 = vld [vmem:[%s244 + $0xa0] sm:$0xf]
      %v299 = vld [vmem:[%s244 + $0xa4] sm:$0xf]
      %v300 = vld [vmem:[%s244 + $0xa8] sm:$0xf]
      %v301 = vld [vmem:[%s244 + $0xac] sm:$0xf]
      %v302 = vld [vmem:[%s244 + $0xb0] sm:$0xf]
      %v303 = vld [vmem:[%s244 + $0xb4] sm:$0xf]
      %v304 = vld [vmem:[%s244 + $0xb8] sm:$0xf]
      %v305 = vld [vmem:[%s244 + $0xbc] sm:$0xf]
      %v306 = vunpack.c.l.bf16 %v258
      %v307 = vunpack.c.l.bf16 %v259
      %v308 = vunpack.c.l.bf16 %v260
      %v309 = vunpack.c.l.bf16 %v261
      %v310 = vunpack.c.l.bf16 %v262
      %v311 = vunpack.c.l.bf16 %v263
      %v312 = vunpack.c.l.bf16 %v264
      %v313 = vunpack.c.l.bf16 %v265
      %v314 = vunpack.c.l.bf16 %v266
      %v315 = vunpack.c.l.bf16 %v267
      %v316 = vunpack.c.l.bf16 %v268
      %v317 = vunpack.c.l.bf16 %v269
      %v318 = vunpack.c.l.bf16 %v270
      %v319 = vunpack.c.l.bf16 %v271
      %v320 = vunpack.c.l.bf16 %v272
      %v321 = vunpack.c.l.bf16 %v273
      %v322 = vunpack.c.l.bf16 %v274
      %v323 = vunpack.c.l.bf16 %v275
      %v324 = vunpack.c.l.bf16 %v276
      %v325 = vunpack.c.l.bf16 %v277
      %v326 = vunpack.c.l.bf16 %v278
      %v327 = vunpack.c.l.bf16 %v279
      %v328 = vunpack.c.l.bf16 %v280
      %v329 = vunpack.c.l.bf16 %v281
      %v330 = vunpack.c.l.bf16 %v282
      %v331 = vunpack.c.l.bf16 %v283
      %v332 = vunpack.c.l.bf16 %v284
      %v333 = vunpack.c.l.bf16 %v285
      %v334 = vunpack.c.l.bf16 %v286
      %v335 = vunpack.c.l.bf16 %v287
      %v336 = vunpack.c.l.bf16 %v288
      %v337 = vunpack.c.l.bf16 %v289
      %v338 = vunpack.c.l.bf16 %v290
      %v339 = vunpack.c.l.bf16 %v291
      %v340 = vunpack.c.l.bf16 %v292
      %v341 = vunpack.c.l.bf16 %v293
      %v342 = vunpack.c.l.bf16 %v294
      %v343 = vunpack.c.l.bf16 %v295
      %v344 = vunpack.c.l.bf16 %v296
      %v345 = vunpack.c.l.bf16 %v297
      %v346 = vunpack.c.l.bf16 %v298
      %v347 = vunpack.c.l.bf16 %v299
      %v348 = vunpack.c.l.bf16 %v300
      %v349 = vunpack.c.l.bf16 %v301
      %v350 = vunpack.c.l.bf16 %v302
      %v351 = vunpack.c.l.bf16 %v303
      %v352 = vunpack.c.l.bf16 %v304
      %v353 = vunpack.c.l.bf16 %v305
      %v354 = vld [vmem:[%s1] sm:$0x1]
      %v355 = vlaneseq
      %v356 = vshrl.u32 %v355, 7
      %v357 = vsub.s32 0, %v356
      %v358 = vrot.slane %v354, %v357
      %v359 = vmul.f32 %v306, %v358
      %v360 = vmul.f32 %v307, %v358
      %v361 = vmul.f32 %v309, %v358
      %v362 = vmul.f32 %v310, %v358
      %v363 = vmul.f32 %v312, %v358
      %v364 = vmul.f32 %v313, %v358
      %v365 = vmul.f32 %v315, %v358
      %v366 = vmul.f32 %v316, %v358
      %v367 = vmul.f32 %v318, %v358
      %v368 = vmul.f32 %v319, %v358
      %v369 = vmul.f32 %v321, %v358
      %v370 = vmul.f32 %v322, %v358
      %v371 = vmul.f32 %v324, %v358
      %v372 = vmul.f32 %v325, %v358
      %v373 = vmul.f32 %v327, %v358
      %v374 = vmul.f32 %v328, %v358
      %v375 = vmul.f32 %v330, %v358
      %v376 = vmul.f32 %v331, %v358
      %v377 = vmul.f32 %v333, %v358
      %v378 = vmul.f32 %v334, %v358
      %v379 = vmul.f32 %v336, %v358
      %v380 = vmul.f32 %v337, %v358
      %v381 = vmul.f32 %v339, %v358
      %v382 = vmul.f32 %v340, %v358
      %v383 = vmul.f32 %v342, %v358
      %v384 = vmul.f32 %v343, %v358
      %v385 = vmul.f32 %v345, %v358
      %v386 = vmul.f32 %v346, %v358
      %v387 = vmul.f32 %v348, %v358
      %v388 = vmul.f32 %v349, %v358
      %v389 = vmul.f32 %v351, %v358
      %v390 = vmul.f32 %v352, %v358
      %s391 = scalar_lea.vmem %s244, 12
      %v392 = vld [vmem:[%s391] sm:$0xf]
      %v393 = vld [vmem:[%s391 + $0x4] sm:$0xf]
      %v394 = vld [vmem:[%s391 + $0x8] sm:$0xf]
      %v395 = vld [vmem:[%s391 + $0xc] sm:$0xf]
      %v396 = vld [vmem:[%s391 + $0x10] sm:$0xf]
      %v397 = vld [vmem:[%s391 + $0x14] sm:$0xf]
      %v398 = vld [vmem:[%s391 + $0x18] sm:$0xf]
      %v399 = vld [vmem:[%s391 + $0x1c] sm:$0xf]
      %v400 = vld [vmem:[%s391 + $0x20] sm:$0xf]
      %v401 = vld [vmem:[%s391 + $0x24] sm:$0xf]
      %v402 = vld [vmem:[%s391 + $0x28] sm:$0xf]
      %v403 = vld [vmem:[%s391 + $0x2c] sm:$0xf]
      %v404 = vld [vmem:[%s391 + $0x30] sm:$0xf]
      %v405 = vld [vmem:[%s391 + $0x34] sm:$0xf]
      %v406 = vld [vmem:[%s391 + $0x38] sm:$0xf]
      %v407 = vld [vmem:[%s391 + $0x3c] sm:$0xf]
      %v408 = vld [vmem:[%s391 + $0x40] sm:$0xf]
      %v409 = vld [vmem:[%s391 + $0x44] sm:$0xf]
      %v410 = vld [vmem:[%s391 + $0x48] sm:$0xf]
      %v411 = vld [vmem:[%s391 + $0x4c] sm:$0xf]
      %v412 = vld [vmem:[%s391 + $0x50] sm:$0xf]
      %v413 = vld [vmem:[%s391 + $0x54] sm:$0xf]
      %v414 = vld [vmem:[%s391 + $0x58] sm:$0xf]
      %v415 = vld [vmem:[%s391 + $0x5c] sm:$0xf]
      %v416 = vld [vmem:[%s391 + $0x60] sm:$0xf]
      %v417 = vld [vmem:[%s391 + $0x64] sm:$0xf]
      %v418 = vld [vmem:[%s391 + $0x68] sm:$0xf]
      %v419 = vld [vmem:[%s391 + $0x6c] sm:$0xf]
      %v420 = vld [vmem:[%s391 + $0x70] sm:$0xf]
      %v421 = vld [vmem:[%s391 + $0x74] sm:$0xf]
      %v422 = vld [vmem:[%s391 + $0x78] sm:$0xf]
      %v423 = vld [vmem:[%s391 + $0x7c] sm:$0xf]
      %v424 = vld [vmem:[%s391 + $0x80] sm:$0xf]
      %v425 = vld [vmem:[%s391 + $0x84] sm:$0xf]
      %v426 = vld [vmem:[%s391 + $0x88] sm:$0xf]
      %v427 = vld [vmem:[%s391 + $0x8c] sm:$0xf]
      %v428 = vld [vmem:[%s391 + $0x90] sm:$0xf]
      %v429 = vld [vmem:[%s391 + $0x94] sm:$0xf]
      %v430 = vld [vmem:[%s391 + $0x98] sm:$0xf]
      %v431 = vld [vmem:[%s391 + $0x9c] sm:$0xf]
      %v432 = vld [vmem:[%s391 + $0xa0] sm:$0xf]
      %v433 = vld [vmem:[%s391 + $0xa4] sm:$0xf]
      %v434 = vld [vmem:[%s391 + $0xa8] sm:$0xf]
      %v435 = vld [vmem:[%s391 + $0xac] sm:$0xf]
      %v436 = vld [vmem:[%s391 + $0xb0] sm:$0xf]
      %v437 = vld [vmem:[%s391 + $0xb4] sm:$0xf]
      %v438 = vld [vmem:[%s391 + $0xb8] sm:$0xf]
      %v439 = vld [vmem:[%s391 + $0xbc] sm:$0xf]
      %v440 = vunpack.c.l.bf16 %v392
      %v441 = vunpack.c.l.bf16 %v393
      %v442 = vunpack.c.l.bf16 %v394
      %v443 = vunpack.c.l.bf16 %v395
      %v444 = vunpack.c.l.bf16 %v396
      %v445 = vunpack.c.l.bf16 %v397
      %v446 = vunpack.c.l.bf16 %v398
      %v447 = vunpack.c.l.bf16 %v399
      %v448 = vunpack.c.l.bf16 %v400
      %v449 = vunpack.c.l.bf16 %v401
      %v450 = vunpack.c.l.bf16 %v402
      %v451 = vunpack.c.l.bf16 %v403
      %v452 = vunpack.c.l.bf16 %v404
      %v453 = vunpack.c.l.bf16 %v405
      %v454 = vunpack.c.l.bf16 %v406
      %v455 = vunpack.c.l.bf16 %v407
      %v456 = vunpack.c.l.bf16 %v408
      %v457 = vunpack.c.l.bf16 %v409
      %v458 = vunpack.c.l.bf16 %v410
      %v459 = vunpack.c.l.bf16 %v411
      %v460 = vunpack.c.l.bf16 %v412
      %v461 = vunpack.c.l.bf16 %v413
      %v462 = vunpack.c.l.bf16 %v414
      %v463 = vunpack.c.l.bf16 %v415
      %v464 = vunpack.c.l.bf16 %v416
      %v465 = vunpack.c.l.bf16 %v417
      %v466 = vunpack.c.l.bf16 %v418
      %v467 = vunpack.c.l.bf16 %v419
      %v468 = vunpack.c.l.bf16 %v420
      %v469 = vunpack.c.l.bf16 %v421
      %v470 = vunpack.c.l.bf16 %v422
      %v471 = vunpack.c.l.bf16 %v423
      %v472 = vunpack.c.l.bf16 %v424
      %v473 = vunpack.c.l.bf16 %v425
      %v474 = vunpack.c.l.bf16 %v426
      %v475 = vunpack.c.l.bf16 %v427
      %v476 = vunpack.c.l.bf16 %v428
      %v477 = vunpack.c.l.bf16 %v429
      %v478 = vunpack.c.l.bf16 %v430
      %v479 = vunpack.c.l.bf16 %v431
      %v480 = vunpack.c.l.bf16 %v432
      %v481 = vunpack.c.l.bf16 %v433
      %v482 = vunpack.c.l.bf16 %v434
      %v483 = vunpack.c.l.bf16 %v435
      %v484 = vunpack.c.l.bf16 %v436
      %v485 = vunpack.c.l.bf16 %v437
      %v486 = vunpack.c.l.bf16 %v438
      %v487 = vunpack.c.l.bf16 %v439
      %v488 = vld [vmem:[%s1 + $0x3] sm:$0x1]
      %v489 = vlaneseq
      %v490 = vshrl.u32 %v489, 7
      %v491 = vsub.s32 0, %v490
      %v492 = vrot.slane %v488, %v491
      %v493 = vmul.f32 %v440, %v492
      %v494 = vmul.f32 %v441, %v492
      %v495 = vmul.f32 %v443, %v492
      %v496 = vmul.f32 %v444, %v492
      %v497 = vmul.f32 %v446, %v492
      %v498 = vmul.f32 %v447, %v492
      %v499 = vmul.f32 %v449, %v492
      %v500 = vmul.f32 %v450, %v492
      %v501 = vmul.f32 %v452, %v492
      %v502 = vmul.f32 %v453, %v492
      %v503 = vmul.f32 %v455, %v492
      %v504 = vmul.f32 %v456, %v492
      %v505 = vmul.f32 %v458, %v492
      %v506 = vmul.f32 %v459, %v492
      %v507 = vmul.f32 %v461, %v492
      %v508 = vmul.f32 %v462, %v492
      %v509 = vmul.f32 %v464, %v492
      %v510 = vmul.f32 %v465, %v492
      %v511 = vmul.f32 %v467, %v492
      %v512 = vmul.f32 %v468, %v492
      %v513 = vmul.f32 %v470, %v492
      %v514 = vmul.f32 %v471, %v492
      %v515 = vmul.f32 %v473, %v492
      %v516 = vmul.f32 %v474, %v492
      %v517 = vmul.f32 %v476, %v492
      %v518 = vmul.f32 %v477, %v492
      %v519 = vmul.f32 %v479, %v492
      %v520 = vmul.f32 %v480, %v492
      %v521 = vmul.f32 %v482, %v492
      %v522 = vmul.f32 %v483, %v492
      %v523 = vmul.f32 %v485, %v492
      %v524 = vmul.f32 %v486, %v492
      %v525 = vadd.f32 %v359, %v493
      %v526 = vadd.f32 %v360, %v494
      %v527 = vadd.f32 %v361, %v495
      %v528 = vadd.f32 %v362, %v496
      %v529 = vadd.f32 %v363, %v497
      %v530 = vadd.f32 %v364, %v498
      %v531 = vadd.f32 %v365, %v499
      %v532 = vadd.f32 %v366, %v500
      %v533 = vadd.f32 %v367, %v501
      %v534 = vadd.f32 %v368, %v502
      %v535 = vadd.f32 %v369, %v503
      %v536 = vadd.f32 %v370, %v504
      %v537 = vadd.f32 %v371, %v505
      %v538 = vadd.f32 %v372, %v506
      %v539 = vadd.f32 %v373, %v507
      %v540 = vadd.f32 %v374, %v508
      %v541 = vadd.f32 %v375, %v509
      %v542 = vadd.f32 %v376, %v510
      %v543 = vadd.f32 %v377, %v511
      %v544 = vadd.f32 %v378, %v512
      %v545 = vadd.f32 %v379, %v513
      %v546 = vadd.f32 %v380, %v514
      %v547 = vadd.f32 %v381, %v515
      %v548 = vadd.f32 %v382, %v516
      %v549 = vadd.f32 %v383, %v517
      %v550 = vadd.f32 %v384, %v518
      %v551 = vadd.f32 %v385, %v519
      %v552 = vadd.f32 %v386, %v520
      %v553 = vadd.f32 %v387, %v521
      %v554 = vadd.f32 %v388, %v522
      %v555 = vadd.f32 %v389, %v523
      %v556 = vadd.f32 %v390, %v524
      %s557 = scalar_lea.vmem %s244, 24
      %v558 = vld [vmem:[%s557] sm:$0xf]
      %v559 = vld [vmem:[%s557 + $0x4] sm:$0xf]
      %v560 = vld [vmem:[%s557 + $0x8] sm:$0xf]
      %v561 = vld [vmem:[%s557 + $0xc] sm:$0xf]
      %v562 = vld [vmem:[%s557 + $0x10] sm:$0xf]
      %v563 = vld [vmem:[%s557 + $0x14] sm:$0xf]
      %v564 = vld [vmem:[%s557 + $0x18] sm:$0xf]
      %v565 = vld [vmem:[%s557 + $0x1c] sm:$0xf]
      %v566 = vld [vmem:[%s557 + $0x20] sm:$0xf]
      %v567 = vld [vmem:[%s557 + $0x24] sm:$0xf]
      %v568 = vld [vmem:[%s557 + $0x28] sm:$0xf]
      %v569 = vld [vmem:[%s557 + $0x2c] sm:$0xf]
      %v570 = vld [vmem:[%s557 + $0x30] sm:$0xf]
      %v571 = vld [vmem:[%s557 + $0x34] sm:$0xf]
      %v572 = vld [vmem:[%s557 + $0x38] sm:$0xf]
      %v573 = vld [vmem:[%s557 + $0x3c] sm:$0xf]
      %v574 = vld [vmem:[%s557 + $0x40] sm:$0xf]
      %v575 = vld [vmem:[%s557 + $0x44] sm:$0xf]
      %v576 = vld [vmem:[%s557 + $0x48] sm:$0xf]
      %v577 = vld [vmem:[%s557 + $0x4c] sm:$0xf]
      %v578 = vld [vmem:[%s557 + $0x50] sm:$0xf]
      %v579 = vld [vmem:[%s557 + $0x54] sm:$0xf]
      %v580 = vld [vmem:[%s557 + $0x58] sm:$0xf]
      %v581 = vld [vmem:[%s557 + $0x5c] sm:$0xf]
      %v582 = vld [vmem:[%s557 + $0x60] sm:$0xf]
      %v583 = vld [vmem:[%s557 + $0x64] sm:$0xf]
      %v584 = vld [vmem:[%s557 + $0x68] sm:$0xf]
      %v585 = vld [vmem:[%s557 + $0x6c] sm:$0xf]
      %v586 = vld [vmem:[%s557 + $0x70] sm:$0xf]
      %v587 = vld [vmem:[%s557 + $0x74] sm:$0xf]
      %v588 = vld [vmem:[%s557 + $0x78] sm:$0xf]
      %v589 = vld [vmem:[%s557 + $0x7c] sm:$0xf]
      %v590 = vld [vmem:[%s557 + $0x80] sm:$0xf]
      %v591 = vld [vmem:[%s557 + $0x84] sm:$0xf]
      %v592 = vld [vmem:[%s557 + $0x88] sm:$0xf]
      %v593 = vld [vmem:[%s557 + $0x8c] sm:$0xf]
      %v594 = vld [vmem:[%s557 + $0x90] sm:$0xf]
      %v595 = vld [vmem:[%s557 + $0x94] sm:$0xf]
      %v596 = vld [vmem:[%s557 + $0x98] sm:$0xf]
      %v597 = vld [vmem:[%s557 + $0x9c] sm:$0xf]
      %v598 = vld [vmem:[%s557 + $0xa0] sm:$0xf]
      %v599 = vld [vmem:[%s557 + $0xa4] sm:$0xf]
      %v600 = vld [vmem:[%s557 + $0xa8] sm:$0xf]
      %v601 = vld [vmem:[%s557 + $0xac] sm:$0xf]
      %v602 = vld [vmem:[%s557 + $0xb0] sm:$0xf]
      %v603 = vld [vmem:[%s557 + $0xb4] sm:$0xf]
      %v604 = vld [vmem:[%s557 + $0xb8] sm:$0xf]
      %v605 = vld [vmem:[%s557 + $0xbc] sm:$0xf]
      %v606 = vunpack.c.l.bf16 %v558
      %v607 = vunpack.c.l.bf16 %v559
      %v608 = vunpack.c.l.bf16 %v560
      %v609 = vunpack.c.l.bf16 %v561
      %v610 = vunpack.c.l.bf16 %v562
      %v611 = vunpack.c.l.bf16 %v563
      %v612 = vunpack.c.l.bf16 %v564
      %v613 = vunpack.c.l.bf16 %v565
      %v614 = vunpack.c.l.bf16 %v566
      %v615 = vunpack.c.l.bf16 %v567
      %v616 = vunpack.c.l.bf16 %v568
      %v617 = vunpack.c.l.bf16 %v569
      %v618 = vunpack.c.l.bf16 %v570
      %v619 = vunpack.c.l.bf16 %v571
      %v620 = vunpack.c.l.bf16 %v572
      %v621 = vunpack.c.l.bf16 %v573
      %v622 = vunpack.c.l.bf16 %v574
      %v623 = vunpack.c.l.bf16 %v575
      %v624 = vunpack.c.l.bf16 %v576
      %v625 = vunpack.c.l.bf16 %v577
      %v626 = vunpack.c.l.bf16 %v578
      %v627 = vunpack.c.l.bf16 %v579
      %v628 = vunpack.c.l.bf16 %v580
      %v629 = vunpack.c.l.bf16 %v581
      %v630 = vunpack.c.l.bf16 %v582
      %v631 = vunpack.c.l.bf16 %v583
      %v632 = vunpack.c.l.bf16 %v584
      %v633 = vunpack.c.l.bf16 %v585
      %v634 = vunpack.c.l.bf16 %v586
      %v635 = vunpack.c.l.bf16 %v587
      %v636 = vunpack.c.l.bf16 %v588
      %v637 = vunpack.c.l.bf16 %v589
      %v638 = vunpack.c.l.bf16 %v590
      %v639 = vunpack.c.l.bf16 %v591
      %v640 = vunpack.c.l.bf16 %v592
      %v641 = vunpack.c.l.bf16 %v593
      %v642 = vunpack.c.l.bf16 %v594
      %v643 = vunpack.c.l.bf16 %v595
      %v644 = vunpack.c.l.bf16 %v596
      %v645 = vunpack.c.l.bf16 %v597
      %v646 = vunpack.c.l.bf16 %v598
      %v647 = vunpack.c.l.bf16 %v599
      %v648 = vunpack.c.l.bf16 %v600
      %v649 = vunpack.c.l.bf16 %v601
      %v650 = vunpack.c.l.bf16 %v602
      %v651 = vunpack.c.l.bf16 %v603
      %v652 = vunpack.c.l.bf16 %v604
      %v653 = vunpack.c.l.bf16 %v605
      %v654 = vld [vmem:[%s1 + $0x6] sm:$0x1]
      %v655 = vlaneseq
      %v656 = vshrl.u32 %v655, 7
      %v657 = vsub.s32 0, %v656
      %v658 = vrot.slane %v654, %v657
      %v659 = vmul.f32 %v606, %v658
      %v660 = vmul.f32 %v607, %v658
      %v661 = vmul.f32 %v609, %v658
      %v662 = vmul.f32 %v610, %v658
      %v663 = vmul.f32 %v612, %v658
      %v664 = vmul.f32 %v613, %v658
      %v665 = vmul.f32 %v615, %v658
      %v666 = vmul.f32 %v616, %v658
      %v667 = vmul.f32 %v618, %v658
      %v668 = vmul.f32 %v619, %v658
      %v669 = vmul.f32 %v621, %v658
      %v670 = vmul.f32 %v622, %v658
      %v671 = vmul.f32 %v624, %v658
      %v672 = vmul.f32 %v625, %v658
      %v673 = vmul.f32 %v627, %v658
      %v674 = vmul.f32 %v628, %v658
      %v675 = vmul.f32 %v630, %v658
      %v676 = vmul.f32 %v631, %v658
      %v677 = vmul.f32 %v633, %v658
      %v678 = vmul.f32 %v634, %v658
      %v679 = vmul.f32 %v636, %v658
      %v680 = vmul.f32 %v637, %v658
      %v681 = vmul.f32 %v639, %v658
      %v682 = vmul.f32 %v640, %v658
      %v683 = vmul.f32 %v642, %v658
      %v684 = vmul.f32 %v643, %v658
      %v685 = vmul.f32 %v645, %v658
      %v686 = vmul.f32 %v646, %v658
      %v687 = vmul.f32 %v648, %v658
      %v688 = vmul.f32 %v649, %v658
      %v689 = vmul.f32 %v651, %v658
      %v690 = vmul.f32 %v652, %v658
      %v691 = vadd.f32 %v525, %v659
      %v692 = vadd.f32 %v526, %v660
      %v693 = vadd.f32 %v527, %v661
      %v694 = vadd.f32 %v528, %v662
      %v695 = vadd.f32 %v529, %v663
      %v696 = vadd.f32 %v530, %v664
      %v697 = vadd.f32 %v531, %v665
      %v698 = vadd.f32 %v532, %v666
      %v699 = vadd.f32 %v533, %v667
      %v700 = vadd.f32 %v534, %v668
      %v701 = vadd.f32 %v535, %v669
      %v702 = vadd.f32 %v536, %v670
      %v703 = vadd.f32 %v537, %v671
      %v704 = vadd.f32 %v538, %v672
      %v705 = vadd.f32 %v539, %v673
      %v706 = vadd.f32 %v540, %v674
      %v707 = vadd.f32 %v541, %v675
      %v708 = vadd.f32 %v542, %v676
      %v709 = vadd.f32 %v543, %v677
      %v710 = vadd.f32 %v544, %v678
      %v711 = vadd.f32 %v545, %v679
      %v712 = vadd.f32 %v546, %v680
      %v713 = vadd.f32 %v547, %v681
      %v714 = vadd.f32 %v548, %v682
      %v715 = vadd.f32 %v549, %v683
      %v716 = vadd.f32 %v550, %v684
      %v717 = vadd.f32 %v551, %v685
      %v718 = vadd.f32 %v552, %v686
      %v719 = vadd.f32 %v553, %v687
      %v720 = vadd.f32 %v554, %v688
      %v721 = vadd.f32 %v555, %v689
      %v722 = vadd.f32 %v556, %v690
      %v723 = vadd.f32 %v691, 0.0
      %v724 = vadd.f32 %v692, 0.0
      %v725 = vadd.f32 %v693, 0.0
      %v726 = vadd.f32 %v694, 0.0
      %v727 = vadd.f32 %v695, 0.0
      %v728 = vadd.f32 %v696, 0.0
      %v729 = vadd.f32 %v697, 0.0
      %v730 = vadd.f32 %v698, 0.0
      %v731 = vadd.f32 %v699, 0.0
      %v732 = vadd.f32 %v700, 0.0
      %v733 = vadd.f32 %v701, 0.0
      %v734 = vadd.f32 %v702, 0.0
      %v735 = vadd.f32 %v703, 0.0
      %v736 = vadd.f32 %v704, 0.0
      %v737 = vadd.f32 %v705, 0.0
      %v738 = vadd.f32 %v706, 0.0
      %v739 = vadd.f32 %v707, 0.0
      %v740 = vadd.f32 %v708, 0.0
      %v741 = vadd.f32 %v709, 0.0
      %v742 = vadd.f32 %v710, 0.0
      %v743 = vadd.f32 %v711, 0.0
      %v744 = vadd.f32 %v712, 0.0
      %v745 = vadd.f32 %v713, 0.0
      %v746 = vadd.f32 %v714, 0.0
      %v747 = vadd.f32 %v715, 0.0
      %v748 = vadd.f32 %v716, 0.0
      %v749 = vadd.f32 %v717, 0.0
      %v750 = vadd.f32 %v718, 0.0
      %v751 = vadd.f32 %v719, 0.0
      %v752 = vadd.f32 %v720, 0.0
      %v753 = vadd.f32 %v721, 0.0
      %v754 = vadd.f32 %v722, 0.0
      %v755 = vld [vmem:[%s1 + $0x1] sm:$0x1]
      %v756 = vlaneseq
      %v757 = vshrl.u32 %v756, 7
      %v758 = vsub.s32 0, %v757
      %v759 = vrot.slane %v755, %v758
      %v760 = vmul.f32 %v306, %v759
      %v761 = vmul.f32 %v307, %v759
      %v762 = vmul.f32 %v308, %v759
      %v763 = vmul.f32 %v309, %v759
      %v764 = vmul.f32 %v310, %v759
      %v765 = vmul.f32 %v311, %v759
      %v766 = vmul.f32 %v312, %v759
      %v767 = vmul.f32 %v313, %v759
      %v768 = vmul.f32 %v314, %v759
      %v769 = vmul.f32 %v315, %v759
      %v770 = vmul.f32 %v316, %v759
      %v771 = vmul.f32 %v317, %v759
      %v772 = vmul.f32 %v318, %v759
      %v773 = vmul.f32 %v319, %v759
      %v774 = vmul.f32 %v320, %v759
      %v775 = vmul.f32 %v321, %v759
      %v776 = vmul.f32 %v322, %v759
      %v777 = vmul.f32 %v323, %v759
      %v778 = vmul.f32 %v324, %v759
      %v779 = vmul.f32 %v325, %v759
      %v780 = vmul.f32 %v326, %v759
      %v781 = vmul.f32 %v327, %v759
      %v782 = vmul.f32 %v328, %v759
      %v783 = vmul.f32 %v329, %v759
      %v784 = vmul.f32 %v330, %v759
      %v785 = vmul.f32 %v331, %v759
      %v786 = vmul.f32 %v332, %v759
      %v787 = vmul.f32 %v333, %v759
      %v788 = vmul.f32 %v334, %v759
      %v789 = vmul.f32 %v335, %v759
      %v790 = vmul.f32 %v336, %v759
      %v791 = vmul.f32 %v337, %v759
      %v792 = vmul.f32 %v338, %v759
      %v793 = vmul.f32 %v339, %v759
      %v794 = vmul.f32 %v340, %v759
      %v795 = vmul.f32 %v341, %v759
      %v796 = vmul.f32 %v342, %v759
      %v797 = vmul.f32 %v343, %v759
      %v798 = vmul.f32 %v344, %v759
      %v799 = vmul.f32 %v345, %v759
      %v800 = vmul.f32 %v346, %v759
      %v801 = vmul.f32 %v347, %v759
      %v802 = vmul.f32 %v348, %v759
      %v803 = vmul.f32 %v349, %v759
      %v804 = vmul.f32 %v350, %v759
      %v805 = vmul.f32 %v351, %v759
      %v806 = vmul.f32 %v352, %v759
      %v807 = vmul.f32 %v353, %v759
      %v808 = vld [vmem:[%s1 + $0x4] sm:$0x1]
      %v809 = vlaneseq
      %v810 = vshrl.u32 %v809, 7
      %v811 = vsub.s32 0, %v810
      %v812 = vrot.slane %v808, %v811
      %v813 = vmul.f32 %v440, %v812
      %v814 = vmul.f32 %v441, %v812
      %v815 = vmul.f32 %v442, %v812
      %v816 = vmul.f32 %v443, %v812
      %v817 = vmul.f32 %v444, %v812
      %v818 = vmul.f32 %v445, %v812
      %v819 = vmul.f32 %v446, %v812
      %v820 = vmul.f32 %v447, %v812
      %v821 = vmul.f32 %v448, %v812
      %v822 = vmul.f32 %v449, %v812
      %v823 = vmul.f32 %v450, %v812
      %v824 = vmul.f32 %v451, %v812
      %v825 = vmul.f32 %v452, %v812
      %v826 = vmul.f32 %v453, %v812
      %v827 = vmul.f32 %v454, %v812
      %v828 = vmul.f32 %v455, %v812
      %v829 = vmul.f32 %v456, %v812
      %v830 = vmul.f32 %v457, %v812
      %v831 = vmul.f32 %v458, %v812
      %v832 = vmul.f32 %v459, %v812
      %v833 = vmul.f32 %v460, %v812
      %v834 = vmul.f32 %v461, %v812
      %v835 = vmul.f32 %v462, %v812
      %v836 = vmul.f32 %v463, %v812
      %v837 = vmul.f32 %v464, %v812
      %v838 = vmul.f32 %v465, %v812
      %v839 = vmul.f32 %v466, %v812
      %v840 = vmul.f32 %v467, %v812
      %v841 = vmul.f32 %v468, %v812
      %v842 = vmul.f32 %v469, %v812
      %v843 = vmul.f32 %v470, %v812
      %v844 = vmul.f32 %v471, %v812
      %v845 = vmul.f32 %v472, %v812
      %v846 = vmul.f32 %v473, %v812
      %v847 = vmul.f32 %v474, %v812
      %v848 = vmul.f32 %v475, %v812
      %v849 = vmul.f32 %v476, %v812
      %v850 = vmul.f32 %v477, %v812
      %v851 = vmul.f32 %v478, %v812
      %v852 = vmul.f32 %v479, %v812
      %v853 = vmul.f32 %v480, %v812
      %v854 = vmul.f32 %v481, %v812
      %v855 = vmul.f32 %v482, %v812
      %v856 = vmul.f32 %v483, %v812
      %v857 = vmul.f32 %v484, %v812
      %v858 = vmul.f32 %v485, %v812
      %v859 = vmul.f32 %v486, %v812
      %v860 = vmul.f32 %v487, %v812
      %v861 = vadd.f32 %v760, %v813
      %v862 = vadd.f32 %v761, %v814
      %v863 = vadd.f32 %v762, %v815
      %v864 = vadd.f32 %v763, %v816
      %v865 = vadd.f32 %v764, %v817
      %v866 = vadd.f32 %v765, %v818
      %v867 = vadd.f32 %v766, %v819
      %v868 = vadd.f32 %v767, %v820
      %v869 = vadd.f32 %v768, %v821
      %v870 = vadd.f32 %v769, %v822
      %v871 = vadd.f32 %v770, %v823
      %v872 = vadd.f32 %v771, %v824
      %v873 = vadd.f32 %v772, %v825
      %v874 = vadd.f32 %v773, %v826
      %v875 = vadd.f32 %v774, %v827
      %v876 = vadd.f32 %v775, %v828
      %v877 = vadd.f32 %v776, %v829
      %v878 = vadd.f32 %v777, %v830
      %v879 = vadd.f32 %v778, %v831
      %v880 = vadd.f32 %v779, %v832
      %v881 = vadd.f32 %v780, %v833
      %v882 = vadd.f32 %v781, %v834
      %v883 = vadd.f32 %v782, %v835
      %v884 = vadd.f32 %v783, %v836
      %v885 = vadd.f32 %v784, %v837
      %v886 = vadd.f32 %v785, %v838
      %v887 = vadd.f32 %v786, %v839
      %v888 = vadd.f32 %v787, %v840
      %v889 = vadd.f32 %v788, %v841
      %v890 = vadd.f32 %v789, %v842
      %v891 = vadd.f32 %v790, %v843
      %v892 = vadd.f32 %v791, %v844
      %v893 = vadd.f32 %v792, %v845
      %v894 = vadd.f32 %v793, %v846
      %v895 = vadd.f32 %v794, %v847
      %v896 = vadd.f32 %v795, %v848
      %v897 = vadd.f32 %v796, %v849
      %v898 = vadd.f32 %v797, %v850
      %v899 = vadd.f32 %v798, %v851
      %v900 = vadd.f32 %v799, %v852
      %v901 = vadd.f32 %v800, %v853
      %v902 = vadd.f32 %v801, %v854
      %v903 = vadd.f32 %v802, %v855
      %v904 = vadd.f32 %v803, %v856
      %v905 = vadd.f32 %v804, %v857
      %v906 = vadd.f32 %v805, %v858
      %v907 = vadd.f32 %v806, %v859
      %v908 = vadd.f32 %v807, %v860
      %v909 = vld [vmem:[%s1 + $0x7] sm:$0x1]
      %v910 = vlaneseq
      %v911 = vshrl.u32 %v910, 7
      %v912 = vsub.s32 0, %v911
      %v913 = vrot.slane %v909, %v912
      %v914 = vmul.f32 %v606, %v913
      %v915 = vmul.f32 %v607, %v913
      %v916 = vmul.f32 %v608, %v913
      %v917 = vmul.f32 %v609, %v913
      %v918 = vmul.f32 %v610, %v913
      %v919 = vmul.f32 %v611, %v913
      %v920 = vmul.f32 %v612, %v913
      %v921 = vmul.f32 %v613, %v913
      %v922 = vmul.f32 %v614, %v913
      %v923 = vmul.f32 %v615, %v913
      %v924 = vmul.f32 %v616, %v913
      %v925 = vmul.f32 %v617, %v913
      %v926 = vmul.f32 %v618, %v913
      %v927 = vmul.f32 %v619, %v913
      %v928 = vmul.f32 %v620, %v913
      %v929 = vmul.f32 %v621, %v913
      %v930 = vmul.f32 %v622, %v913
      %v931 = vmul.f32 %v623, %v913
      %v932 = vmul.f32 %v624, %v913
      %v933 = vmul.f32 %v625, %v913
      %v934 = vmul.f32 %v626, %v913
      %v935 = vmul.f32 %v627, %v913
      %v936 = vmul.f32 %v628, %v913
      %v937 = vmul.f32 %v629, %v913
      %v938 = vmul.f32 %v630, %v913
      %v939 = vmul.f32 %v631, %v913
      %v940 = vmul.f32 %v632, %v913
      %v941 = vmul.f32 %v633, %v913
      %v942 = vmul.f32 %v634, %v913
      %v943 = vmul.f32 %v635, %v913
      %v944 = vmul.f32 %v636, %v913
      %v945 = vmul.f32 %v637, %v913
      %v946 = vmul.f32 %v638, %v913
      %v947 = vmul.f32 %v639, %v913
      %v948 = vmul.f32 %v640, %v913
      %v949 = vmul.f32 %v641, %v913
      %v950 = vmul.f32 %v642, %v913
      %v951 = vmul.f32 %v643, %v913
      %v952 = vmul.f32 %v644, %v913
      %v953 = vmul.f32 %v645, %v913
      %v954 = vmul.f32 %v646, %v913
      %v955 = vmul.f32 %v647, %v913
      %v956 = vmul.f32 %v648, %v913
      %v957 = vmul.f32 %v649, %v913
      %v958 = vmul.f32 %v650, %v913
      %v959 = vmul.f32 %v651, %v913
      %v960 = vmul.f32 %v652, %v913
      %v961 = vmul.f32 %v653, %v913
      %v962 = vadd.f32 %v861, %v914
      %v963 = vadd.f32 %v862, %v915
      %v964 = vadd.f32 %v863, %v916
      %v965 = vadd.f32 %v864, %v917
      %v966 = vadd.f32 %v865, %v918
      %v967 = vadd.f32 %v866, %v919
      %v968 = vadd.f32 %v867, %v920
      %v969 = vadd.f32 %v868, %v921
      %v970 = vadd.f32 %v869, %v922
      %v971 = vadd.f32 %v870, %v923
      %v972 = vadd.f32 %v871, %v924
      %v973 = vadd.f32 %v872, %v925
      %v974 = vadd.f32 %v873, %v926
      %v975 = vadd.f32 %v874, %v927
      %v976 = vadd.f32 %v875, %v928
      %v977 = vadd.f32 %v876, %v929
      %v978 = vadd.f32 %v877, %v930
      %v979 = vadd.f32 %v878, %v931
      %v980 = vadd.f32 %v879, %v932
      %v981 = vadd.f32 %v880, %v933
      %v982 = vadd.f32 %v881, %v934
      %v983 = vadd.f32 %v882, %v935
      %v984 = vadd.f32 %v883, %v936
      %v985 = vadd.f32 %v884, %v937
      %v986 = vadd.f32 %v885, %v938
      %v987 = vadd.f32 %v886, %v939
      %v988 = vadd.f32 %v887, %v940
      %v989 = vadd.f32 %v888, %v941
      %v990 = vadd.f32 %v889, %v942
      %v991 = vadd.f32 %v890, %v943
      %v992 = vadd.f32 %v891, %v944
      %v993 = vadd.f32 %v892, %v945
      %v994 = vadd.f32 %v893, %v946
      %v995 = vadd.f32 %v894, %v947
      %v996 = vadd.f32 %v895, %v948
      %v997 = vadd.f32 %v896, %v949
      %v998 = vadd.f32 %v897, %v950
      %v999 = vadd.f32 %v898, %v951
      %v1000 = vadd.f32 %v899, %v952
      %v1001 = vadd.f32 %v900, %v953
      %v1002 = vadd.f32 %v901, %v954
      %v1003 = vadd.f32 %v902, %v955
      %v1004 = vadd.f32 %v903, %v956
      %v1005 = vadd.f32 %v904, %v957
      %v1006 = vadd.f32 %v905, %v958
      %v1007 = vadd.f32 %v906, %v959
      %v1008 = vadd.f32 %v907, %v960
      %v1009 = vadd.f32 %v908, %v961
      %v1010 = vrot.slane %v962, 1
      %v1011 = vrot.slane %v965, 1
      %v1012 = vrot.slane %v968, 1
      %v1013 = vrot.slane %v971, 1
      %v1014 = vrot.slane %v974, 1
      %v1015 = vrot.slane %v977, 1
      %v1016 = vrot.slane %v980, 1
      %v1017 = vrot.slane %v983, 1
      %v1018 = vrot.slane %v986, 1
      %v1019 = vrot.slane %v989, 1
      %v1020 = vrot.slane %v992, 1
      %v1021 = vrot.slane %v995, 1
      %v1022 = vrot.slane %v998, 1
      %v1023 = vrot.slane %v1001, 1
      %v1024 = vrot.slane %v1004, 1
      %v1025 = vrot.slane %v1007, 1
      %v1026 = vrot.slane %v963, 1
      %v1027 = vrot.slane %v966, 1
      %v1028 = vrot.slane %v969, 1
      %v1029 = vrot.slane %v972, 1
      %v1030 = vrot.slane %v975, 1
      %v1031 = vrot.slane %v978, 1
      %v1032 = vrot.slane %v981, 1
      %v1033 = vrot.slane %v984, 1
      %v1034 = vrot.slane %v987, 1
      %v1035 = vrot.slane %v990, 1
      %v1036 = vrot.slane %v993, 1
      %v1037 = vrot.slane %v996, 1
      %v1038 = vrot.slane %v999, 1
      %v1039 = vrot.slane %v1002, 1
      %v1040 = vrot.slane %v1005, 1
      %v1041 = vrot.slane %v1008, 1
      %v1042 = vrot.slane %v964, 1
      %v1043 = vrot.slane %v967, 1
      %v1044 = vrot.slane %v970, 1
      %v1045 = vrot.slane %v973, 1
      %v1046 = vrot.slane %v976, 1
      %v1047 = vrot.slane %v979, 1
      %v1048 = vrot.slane %v982, 1
      %v1049 = vrot.slane %v985, 1
      %v1050 = vrot.slane %v988, 1
      %v1051 = vrot.slane %v991, 1
      %v1052 = vrot.slane %v994, 1
      %v1053 = vrot.slane %v997, 1
      %v1054 = vrot.slane %v1000, 1
      %v1055 = vrot.slane %v1003, 1
      %v1056 = vrot.slane %v1006, 1
      %v1057 = vrot.slane %v1009, 1
      %v1058 = vlaneseq
      %v1059 = vshrl.u32 %v1058, 7
      %vm1060 = vcmp.lt.s32.totalorder %v1059, 7
      %v1061 = vsel %vm1060, %v1026, %v1042
      %v1062 = vsel %vm1060, %v1027, %v1043
      %v1063 = vsel %vm1060, %v1028, %v1044
      %v1064 = vsel %vm1060, %v1029, %v1045
      %v1065 = vsel %vm1060, %v1030, %v1046
      %v1066 = vsel %vm1060, %v1031, %v1047
      %v1067 = vsel %vm1060, %v1032, %v1048
      %v1068 = vsel %vm1060, %v1033, %v1049
      %v1069 = vsel %vm1060, %v1034, %v1050
      %v1070 = vsel %vm1060, %v1035, %v1051
      %v1071 = vsel %vm1060, %v1036, %v1052
      %v1072 = vsel %vm1060, %v1037, %v1053
      %v1073 = vsel %vm1060, %v1038, %v1054
      %v1074 = vsel %vm1060, %v1039, %v1055
      %v1075 = vsel %vm1060, %v1040, %v1056
      %v1076 = vsel %vm1060, %v1041, %v1057
      %v1077 = vsel %vm1060, %v1010, %v1026
      %v1078 = vsel %vm1060, %v1011, %v1027
      %v1079 = vsel %vm1060, %v1012, %v1028
      %v1080 = vsel %vm1060, %v1013, %v1029
      %v1081 = vsel %vm1060, %v1014, %v1030
      %v1082 = vsel %vm1060, %v1015, %v1031
      %v1083 = vsel %vm1060, %v1016, %v1032
      %v1084 = vsel %vm1060, %v1017, %v1033
      %v1085 = vsel %vm1060, %v1018, %v1034
      %v1086 = vsel %vm1060, %v1019, %v1035
      %v1087 = vsel %vm1060, %v1020, %v1036
      %v1088 = vsel %vm1060, %v1021, %v1037
      %v1089 = vsel %vm1060, %v1022, %v1038
      %v1090 = vsel %vm1060, %v1023, %v1039
      %v1091 = vsel %vm1060, %v1024, %v1040
      %v1092 = vsel %vm1060, %v1025, %v1041
      %v1093 = vadd.f32 %v723, %v1077
      %v1094 = vadd.f32 %v724, %v1061
      %v1095 = vadd.f32 %v725, %v1078
      %v1096 = vadd.f32 %v726, %v1062
      %v1097 = vadd.f32 %v727, %v1079
      %v1098 = vadd.f32 %v728, %v1063
      %v1099 = vadd.f32 %v729, %v1080
      %v1100 = vadd.f32 %v730, %v1064
      %v1101 = vadd.f32 %v731, %v1081
      %v1102 = vadd.f32 %v732, %v1065
      %v1103 = vadd.f32 %v733, %v1082
      %v1104 = vadd.f32 %v734, %v1066
      %v1105 = vadd.f32 %v735, %v1083
      %v1106 = vadd.f32 %v736, %v1067
      %v1107 = vadd.f32 %v737, %v1084
      %v1108 = vadd.f32 %v738, %v1068
      %v1109 = vadd.f32 %v739, %v1085
      %v1110 = vadd.f32 %v740, %v1069
      %v1111 = vadd.f32 %v741, %v1086
      %v1112 = vadd.f32 %v742, %v1070
      %v1113 = vadd.f32 %v743, %v1087
      %v1114 = vadd.f32 %v744, %v1071
      %v1115 = vadd.f32 %v745, %v1088
      %v1116 = vadd.f32 %v746, %v1072
      %v1117 = vadd.f32 %v747, %v1089
      %v1118 = vadd.f32 %v748, %v1073
      %v1119 = vadd.f32 %v749, %v1090
      %v1120 = vadd.f32 %v750, %v1074
      %v1121 = vadd.f32 %v751, %v1091
      %v1122 = vadd.f32 %v752, %v1075
      %v1123 = vadd.f32 %v753, %v1092
      %v1124 = vadd.f32 %v754, %v1076
      %v1125 = vld [vmem:[%s1 + $0x2] sm:$0x1]
      %v1126 = vlaneseq
      %v1127 = vshrl.u32 %v1126, 7
      %v1128 = vsub.s32 0, %v1127
      %v1129 = vrot.slane %v1125, %v1128
      %v1130 = vmul.f32 %v306, %v1129
      %v1131 = vmul.f32 %v307, %v1129
      %v1132 = vmul.f32 %v308, %v1129
      %v1133 = vmul.f32 %v309, %v1129
      %v1134 = vmul.f32 %v310, %v1129
      %v1135 = vmul.f32 %v311, %v1129
      %v1136 = vmul.f32 %v312, %v1129
      %v1137 = vmul.f32 %v313, %v1129
      %v1138 = vmul.f32 %v314, %v1129
      %v1139 = vmul.f32 %v315, %v1129
      %v1140 = vmul.f32 %v316, %v1129
      %v1141 = vmul.f32 %v317, %v1129
      %v1142 = vmul.f32 %v318, %v1129
      %v1143 = vmul.f32 %v319, %v1129
      %v1144 = vmul.f32 %v320, %v1129
      %v1145 = vmul.f32 %v321, %v1129
      %v1146 = vmul.f32 %v322, %v1129
      %v1147 = vmul.f32 %v323, %v1129
      %v1148 = vmul.f32 %v324, %v1129
      %v1149 = vmul.f32 %v325, %v1129
      %v1150 = vmul.f32 %v326, %v1129
      %v1151 = vmul.f32 %v327, %v1129
      %v1152 = vmul.f32 %v328, %v1129
      %v1153 = vmul.f32 %v329, %v1129
      %v1154 = vmul.f32 %v330, %v1129
      %v1155 = vmul.f32 %v331, %v1129
      %v1156 = vmul.f32 %v332, %v1129
      %v1157 = vmul.f32 %v333, %v1129
      %v1158 = vmul.f32 %v334, %v1129
      %v1159 = vmul.f32 %v335, %v1129
      %v1160 = vmul.f32 %v336, %v1129
      %v1161 = vmul.f32 %v337, %v1129
      %v1162 = vmul.f32 %v338, %v1129
      %v1163 = vmul.f32 %v339, %v1129
      %v1164 = vmul.f32 %v340, %v1129
      %v1165 = vmul.f32 %v341, %v1129
      %v1166 = vmul.f32 %v342, %v1129
      %v1167 = vmul.f32 %v343, %v1129
      %v1168 = vmul.f32 %v344, %v1129
      %v1169 = vmul.f32 %v345, %v1129
      %v1170 = vmul.f32 %v346, %v1129
      %v1171 = vmul.f32 %v347, %v1129
      %v1172 = vmul.f32 %v348, %v1129
      %v1173 = vmul.f32 %v349, %v1129
      %v1174 = vmul.f32 %v350, %v1129
      %v1175 = vmul.f32 %v351, %v1129
      %v1176 = vmul.f32 %v352, %v1129
      %v1177 = vmul.f32 %v353, %v1129
      %v1178 = vld [vmem:[%s1 + $0x5] sm:$0x1]
      %v1179 = vlaneseq
      %v1180 = vshrl.u32 %v1179, 7
      %v1181 = vsub.s32 0, %v1180
      %v1182 = vrot.slane %v1178, %v1181
      %v1183 = vmul.f32 %v440, %v1182
      %v1184 = vmul.f32 %v441, %v1182
      %v1185 = vmul.f32 %v442, %v1182
      %v1186 = vmul.f32 %v443, %v1182
      %v1187 = vmul.f32 %v444, %v1182
      %v1188 = vmul.f32 %v445, %v1182
      %v1189 = vmul.f32 %v446, %v1182
      %v1190 = vmul.f32 %v447, %v1182
      %v1191 = vmul.f32 %v448, %v1182
      %v1192 = vmul.f32 %v449, %v1182
      %v1193 = vmul.f32 %v450, %v1182
      %v1194 = vmul.f32 %v451, %v1182
      %v1195 = vmul.f32 %v452, %v1182
      %v1196 = vmul.f32 %v453, %v1182
      %v1197 = vmul.f32 %v454, %v1182
      %v1198 = vmul.f32 %v455, %v1182
      %v1199 = vmul.f32 %v456, %v1182
      %v1200 = vmul.f32 %v457, %v1182
      %v1201 = vmul.f32 %v458, %v1182
      %v1202 = vmul.f32 %v459, %v1182
      %v1203 = vmul.f32 %v460, %v1182
      %v1204 = vmul.f32 %v461, %v1182
      %v1205 = vmul.f32 %v462, %v1182
      %v1206 = vmul.f32 %v463, %v1182
      %v1207 = vmul.f32 %v464, %v1182
      %v1208 = vmul.f32 %v465, %v1182
      %v1209 = vmul.f32 %v466, %v1182
      %v1210 = vmul.f32 %v467, %v1182
      %v1211 = vmul.f32 %v468, %v1182
      %v1212 = vmul.f32 %v469, %v1182
      %v1213 = vmul.f32 %v470, %v1182
      %v1214 = vmul.f32 %v471, %v1182
      %v1215 = vmul.f32 %v472, %v1182
      %v1216 = vmul.f32 %v473, %v1182
      %v1217 = vmul.f32 %v474, %v1182
      %v1218 = vmul.f32 %v475, %v1182
      %v1219 = vmul.f32 %v476, %v1182
      %v1220 = vmul.f32 %v477, %v1182
      %v1221 = vmul.f32 %v478, %v1182
      %v1222 = vmul.f32 %v479, %v1182
      %v1223 = vmul.f32 %v480, %v1182
      %v1224 = vmul.f32 %v481, %v1182
      %v1225 = vmul.f32 %v482, %v1182
      %v1226 = vmul.f32 %v483, %v1182
      %v1227 = vmul.f32 %v484, %v1182
      %v1228 = vmul.f32 %v485, %v1182
      %v1229 = vmul.f32 %v486, %v1182
      %v1230 = vmul.f32 %v487, %v1182
      %v1231 = vadd.f32 %v1130, %v1183
      %v1232 = vadd.f32 %v1131, %v1184
      %v1233 = vadd.f32 %v1132, %v1185
      %v1234 = vadd.f32 %v1133, %v1186
      %v1235 = vadd.f32 %v1134, %v1187
      %v1236 = vadd.f32 %v1135, %v1188
      %v1237 = vadd.f32 %v1136, %v1189
      %v1238 = vadd.f32 %v1137, %v1190
      %v1239 = vadd.f32 %v1138, %v1191
      %v1240 = vadd.f32 %v1139, %v1192
      %v1241 = vadd.f32 %v1140, %v1193
      %v1242 = vadd.f32 %v1141, %v1194
      %v1243 = vadd.f32 %v1142, %v1195
      %v1244 = vadd.f32 %v1143, %v1196
      %v1245 = vadd.f32 %v1144, %v1197
      %v1246 = vadd.f32 %v1145, %v1198
      %v1247 = vadd.f32 %v1146, %v1199
      %v1248 = vadd.f32 %v1147, %v1200
      %v1249 = vadd.f32 %v1148, %v1201
      %v1250 = vadd.f32 %v1149, %v1202
      %v1251 = vadd.f32 %v1150, %v1203
      %v1252 = vadd.f32 %v1151, %v1204
      %v1253 = vadd.f32 %v1152, %v1205
      %v1254 = vadd.f32 %v1153, %v1206
      %v1255 = vadd.f32 %v1154, %v1207
      %v1256 = vadd.f32 %v1155, %v1208
      %v1257 = vadd.f32 %v1156, %v1209
      %v1258 = vadd.f32 %v1157, %v1210
      %v1259 = vadd.f32 %v1158, %v1211
      %v1260 = vadd.f32 %v1159, %v1212
      %v1261 = vadd.f32 %v1160, %v1213
      %v1262 = vadd.f32 %v1161, %v1214
      %v1263 = vadd.f32 %v1162, %v1215
      %v1264 = vadd.f32 %v1163, %v1216
      %v1265 = vadd.f32 %v1164, %v1217
      %v1266 = vadd.f32 %v1165, %v1218
      %v1267 = vadd.f32 %v1166, %v1219
      %v1268 = vadd.f32 %v1167, %v1220
      %v1269 = vadd.f32 %v1168, %v1221
      %v1270 = vadd.f32 %v1169, %v1222
      %v1271 = vadd.f32 %v1170, %v1223
      %v1272 = vadd.f32 %v1171, %v1224
      %v1273 = vadd.f32 %v1172, %v1225
      %v1274 = vadd.f32 %v1173, %v1226
      %v1275 = vadd.f32 %v1174, %v1227
      %v1276 = vadd.f32 %v1175, %v1228
      %v1277 = vadd.f32 %v1176, %v1229
      %v1278 = vadd.f32 %v1177, %v1230
      %v1279 = vld [vmem:[%s1 + $0x8] sm:$0x1]
      %v1280 = vlaneseq
      %v1281 = vshrl.u32 %v1280, 7
      %v1282 = vsub.s32 0, %v1281
      %v1283 = vrot.slane %v1279, %v1282
      %v1284 = vmul.f32 %v606, %v1283
      %v1285 = vmul.f32 %v607, %v1283
      %v1286 = vmul.f32 %v608, %v1283
      %v1287 = vmul.f32 %v609, %v1283
      %v1288 = vmul.f32 %v610, %v1283
      %v1289 = vmul.f32 %v611, %v1283
      %v1290 = vmul.f32 %v612, %v1283
      %v1291 = vmul.f32 %v613, %v1283
      %v1292 = vmul.f32 %v614, %v1283
      %v1293 = vmul.f32 %v615, %v1283
      %v1294 = vmul.f32 %v616, %v1283
      %v1295 = vmul.f32 %v617, %v1283
      %v1296 = vmul.f32 %v618, %v1283
      %v1297 = vmul.f32 %v619, %v1283
      %v1298 = vmul.f32 %v620, %v1283
      %v1299 = vmul.f32 %v621, %v1283
      %v1300 = vmul.f32 %v622, %v1283
      %v1301 = vmul.f32 %v623, %v1283
      %v1302 = vmul.f32 %v624, %v1283
      %v1303 = vmul.f32 %v625, %v1283
      %v1304 = vmul.f32 %v626, %v1283
      %v1305 = vmul.f32 %v627, %v1283
      %v1306 = vmul.f32 %v628, %v1283
      %v1307 = vmul.f32 %v629, %v1283
      %v1308 = vmul.f32 %v630, %v1283
      %v1309 = vmul.f32 %v631, %v1283
      %v1310 = vmul.f32 %v632, %v1283
      %v1311 = vmul.f32 %v633, %v1283
      %v1312 = vmul.f32 %v634, %v1283
      %v1313 = vmul.f32 %v635, %v1283
      %v1314 = vmul.f32 %v636, %v1283
      %v1315 = vmul.f32 %v637, %v1283
      %v1316 = vmul.f32 %v638, %v1283
      %v1317 = vmul.f32 %v639, %v1283
      %v1318 = vmul.f32 %v640, %v1283
      %v1319 = vmul.f32 %v641, %v1283
      %v1320 = vmul.f32 %v642, %v1283
      %v1321 = vmul.f32 %v643, %v1283
      %v1322 = vmul.f32 %v644, %v1283
      %v1323 = vmul.f32 %v645, %v1283
      %v1324 = vmul.f32 %v646, %v1283
      %v1325 = vmul.f32 %v647, %v1283
      %v1326 = vmul.f32 %v648, %v1283
      %v1327 = vmul.f32 %v649, %v1283
      %v1328 = vmul.f32 %v650, %v1283
      %v1329 = vmul.f32 %v651, %v1283
      %v1330 = vmul.f32 %v652, %v1283
      %v1331 = vmul.f32 %v653, %v1283
      %v1332 = vadd.f32 %v1231, %v1284
      %v1333 = vadd.f32 %v1232, %v1285
      %v1334 = vadd.f32 %v1233, %v1286
      %v1335 = vadd.f32 %v1234, %v1287
      %v1336 = vadd.f32 %v1235, %v1288
      %v1337 = vadd.f32 %v1236, %v1289
      %v1338 = vadd.f32 %v1237, %v1290
      %v1339 = vadd.f32 %v1238, %v1291
      %v1340 = vadd.f32 %v1239, %v1292
      %v1341 = vadd.f32 %v1240, %v1293
      %v1342 = vadd.f32 %v1241, %v1294
      %v1343 = vadd.f32 %v1242, %v1295
      %v1344 = vadd.f32 %v1243, %v1296
      %v1345 = vadd.f32 %v1244, %v1297
      %v1346 = vadd.f32 %v1245, %v1298
      %v1347 = vadd.f32 %v1246, %v1299
      %v1348 = vadd.f32 %v1247, %v1300
      %v1349 = vadd.f32 %v1248, %v1301
      %v1350 = vadd.f32 %v1249, %v1302
      %v1351 = vadd.f32 %v1250, %v1303
      %v1352 = vadd.f32 %v1251, %v1304
      %v1353 = vadd.f32 %v1252, %v1305
      %v1354 = vadd.f32 %v1253, %v1306
      %v1355 = vadd.f32 %v1254, %v1307
      %v1356 = vadd.f32 %v1255, %v1308
      %v1357 = vadd.f32 %v1256, %v1309
      %v1358 = vadd.f32 %v1257, %v1310
      %v1359 = vadd.f32 %v1258, %v1311
      %v1360 = vadd.f32 %v1259, %v1312
      %v1361 = vadd.f32 %v1260, %v1313
      %v1362 = vadd.f32 %v1261, %v1314
      %v1363 = vadd.f32 %v1262, %v1315
      %v1364 = vadd.f32 %v1263, %v1316
      %v1365 = vadd.f32 %v1264, %v1317
      %v1366 = vadd.f32 %v1265, %v1318
      %v1367 = vadd.f32 %v1266, %v1319
      %v1368 = vadd.f32 %v1267, %v1320
      %v1369 = vadd.f32 %v1268, %v1321
      %v1370 = vadd.f32 %v1269, %v1322
      %v1371 = vadd.f32 %v1270, %v1323
      %v1372 = vadd.f32 %v1271, %v1324
      %v1373 = vadd.f32 %v1272, %v1325
      %v1374 = vadd.f32 %v1273, %v1326
      %v1375 = vadd.f32 %v1274, %v1327
      %v1376 = vadd.f32 %v1275, %v1328
      %v1377 = vadd.f32 %v1276, %v1329
      %v1378 = vadd.f32 %v1277, %v1330
      %v1379 = vadd.f32 %v1278, %v1331
      %v1380 = vrot.slane %v1332, 2
      %v1381 = vrot.slane %v1335, 2
      %v1382 = vrot.slane %v1338, 2
      %v1383 = vrot.slane %v1341, 2
      %v1384 = vrot.slane %v1344, 2
      %v1385 = vrot.slane %v1347, 2
      %v1386 = vrot.slane %v1350, 2
      %v1387 = vrot.slane %v1353, 2
      %v1388 = vrot.slane %v1356, 2
      %v1389 = vrot.slane %v1359, 2
      %v1390 = vrot.slane %v1362, 2
      %v1391 = vrot.slane %v1365, 2
      %v1392 = vrot.slane %v1368, 2
      %v1393 = vrot.slane %v1371, 2
      %v1394 = vrot.slane %v1374, 2
      %v1395 = vrot.slane %v1377, 2
      %v1396 = vrot.slane %v1333, 2
      %v1397 = vrot.slane %v1336, 2
      %v1398 = vrot.slane %v1339, 2
      %v1399 = vrot.slane %v1342, 2
      %v1400 = vrot.slane %v1345, 2
      %v1401 = vrot.slane %v1348, 2
      %v1402 = vrot.slane %v1351, 2
      %v1403 = vrot.slane %v1354, 2
      %v1404 = vrot.slane %v1357, 2
      %v1405 = vrot.slane %v1360, 2
      %v1406 = vrot.slane %v1363, 2
      %v1407 = vrot.slane %v1366, 2
      %v1408 = vrot.slane %v1369, 2
      %v1409 = vrot.slane %v1372, 2
      %v1410 = vrot.slane %v1375, 2
      %v1411 = vrot.slane %v1378, 2
      %v1412 = vrot.slane %v1334, 2
      %v1413 = vrot.slane %v1337, 2
      %v1414 = vrot.slane %v1340, 2
      %v1415 = vrot.slane %v1343, 2
      %v1416 = vrot.slane %v1346, 2
      %v1417 = vrot.slane %v1349, 2
      %v1418 = vrot.slane %v1352, 2
      %v1419 = vrot.slane %v1355, 2
      %v1420 = vrot.slane %v1358, 2
      %v1421 = vrot.slane %v1361, 2
      %v1422 = vrot.slane %v1364, 2
      %v1423 = vrot.slane %v1367, 2
      %v1424 = vrot.slane %v1370, 2
      %v1425 = vrot.slane %v1373, 2
      %v1426 = vrot.slane %v1376, 2
      %v1427 = vrot.slane %v1379, 2
      %vm1428 = vcmp.lt.s32.totalorder %v1059, 6
      %v1429 = vsel %vm1428, %v1396, %v1412
      %v1430 = vsel %vm1428, %v1397, %v1413
      %v1431 = vsel %vm1428, %v1398, %v1414
      %v1432 = vsel %vm1428, %v1399, %v1415
      %v1433 = vsel %vm1428, %v1400, %v1416
      %v1434 = vsel %vm1428, %v1401, %v1417
      %v1435 = vsel %vm1428, %v1402, %v1418
      %v1436 = vsel %vm1428, %v1403, %v1419
      %v1437 = vsel %vm1428, %v1404, %v1420
      %v1438 = vsel %vm1428, %v1405, %v1421
      %v1439 = vsel %vm1428, %v1406, %v1422
      %v1440 = vsel %vm1428, %v1407, %v1423
      %v1441 = vsel %vm1428, %v1408, %v1424
      %v1442 = vsel %vm1428, %v1409, %v1425
      %v1443 = vsel %vm1428, %v1410, %v1426
      %v1444 = vsel %vm1428, %v1411, %v1427
      %v1445 = vsel %vm1428, %v1380, %v1396
      %v1446 = vsel %vm1428, %v1381, %v1397
      %v1447 = vsel %vm1428, %v1382, %v1398
      %v1448 = vsel %vm1428, %v1383, %v1399
      %v1449 = vsel %vm1428, %v1384, %v1400
      %v1450 = vsel %vm1428, %v1385, %v1401
      %v1451 = vsel %vm1428, %v1386, %v1402
      %v1452 = vsel %vm1428, %v1387, %v1403
      %v1453 = vsel %vm1428, %v1388, %v1404
      %v1454 = vsel %vm1428, %v1389, %v1405
      %v1455 = vsel %vm1428, %v1390, %v1406
      %v1456 = vsel %vm1428, %v1391, %v1407
      %v1457 = vsel %vm1428, %v1392, %v1408
      %v1458 = vsel %vm1428, %v1393, %v1409
      %v1459 = vsel %vm1428, %v1394, %v1410
      %v1460 = vsel %vm1428, %v1395, %v1411
      %v1461 = vadd.f32 %v1093, %v1445
      %v1462 = vadd.f32 %v1094, %v1429
      %v1463 = vadd.f32 %v1095, %v1446
      %v1464 = vadd.f32 %v1096, %v1430
      %v1465 = vadd.f32 %v1097, %v1447
      %v1466 = vadd.f32 %v1098, %v1431
      %v1467 = vadd.f32 %v1099, %v1448
      %v1468 = vadd.f32 %v1100, %v1432
      %v1469 = vadd.f32 %v1101, %v1449
      %v1470 = vadd.f32 %v1102, %v1433
      %v1471 = vadd.f32 %v1103, %v1450
      %v1472 = vadd.f32 %v1104, %v1434
      %v1473 = vadd.f32 %v1105, %v1451
      %v1474 = vadd.f32 %v1106, %v1435
      %v1475 = vadd.f32 %v1107, %v1452
      %v1476 = vadd.f32 %v1108, %v1436
      %v1477 = vadd.f32 %v1109, %v1453
      %v1478 = vadd.f32 %v1110, %v1437
      %v1479 = vadd.f32 %v1111, %v1454
      %v1480 = vadd.f32 %v1112, %v1438
      %v1481 = vadd.f32 %v1113, %v1455
      %v1482 = vadd.f32 %v1114, %v1439
      %v1483 = vadd.f32 %v1115, %v1456
      %v1484 = vadd.f32 %v1116, %v1440
      %v1485 = vadd.f32 %v1117, %v1457
      %v1486 = vadd.f32 %v1118, %v1441
      %v1487 = vadd.f32 %v1119, %v1458
      %v1488 = vadd.f32 %v1120, %v1442
      %v1489 = vadd.f32 %v1121, %v1459
      %v1490 = vadd.f32 %v1122, %v1443
      %v1491 = vadd.f32 %v1123, %v1460
      %v1492 = vadd.f32 %v1124, %v1444
      %v1493 = vld [vmem:[%s2] sm:$0x1]
      %v1494 = vlaneseq
      %v1495 = vshrl.u32 %v1494, 7
      %v1496 = vsub.s32 0, %v1495
      %v1497 = vrot.slane %v1493, %v1496
      %v1498 = vmul.f32 %v1461, %v1497
      %v1499 = vmul.f32 %v1462, %v1497
      %v1500 = vmul.f32 %v1463, %v1497
      %v1501 = vmul.f32 %v1464, %v1497
      %v1502 = vmul.f32 %v1465, %v1497
      %v1503 = vmul.f32 %v1466, %v1497
      %v1504 = vmul.f32 %v1467, %v1497
      %v1505 = vmul.f32 %v1468, %v1497
      %v1506 = vmul.f32 %v1469, %v1497
      %v1507 = vmul.f32 %v1470, %v1497
      %v1508 = vmul.f32 %v1471, %v1497
      %v1509 = vmul.f32 %v1472, %v1497
      %v1510 = vmul.f32 %v1473, %v1497
      %v1511 = vmul.f32 %v1474, %v1497
      %v1512 = vmul.f32 %v1475, %v1497
      %v1513 = vmul.f32 %v1476, %v1497
      %v1514 = vmul.f32 %v1477, %v1497
      %v1515 = vmul.f32 %v1478, %v1497
      %v1516 = vmul.f32 %v1479, %v1497
      %v1517 = vmul.f32 %v1480, %v1497
      %v1518 = vmul.f32 %v1481, %v1497
      %v1519 = vmul.f32 %v1482, %v1497
      %v1520 = vmul.f32 %v1483, %v1497
      %v1521 = vmul.f32 %v1484, %v1497
      %v1522 = vmul.f32 %v1485, %v1497
      %v1523 = vmul.f32 %v1486, %v1497
      %v1524 = vmul.f32 %v1487, %v1497
      %v1525 = vmul.f32 %v1488, %v1497
      %v1526 = vmul.f32 %v1489, %v1497
      %v1527 = vmul.f32 %v1490, %v1497
      %v1528 = vmul.f32 %v1491, %v1497
      %v1529 = vmul.f32 %v1492, %v1497
      %v1530 = vld [vmem:[%s2 + $0x1] sm:$0x1]
      %v1531 = vlaneseq
      %v1532 = vshrl.u32 %v1531, 7
      %v1533 = vsub.s32 0, %v1532
      %v1534 = vrot.slane %v1530, %v1533
      %v1535 = vadd.f32 %v1498, %v1534
      %v1536 = vadd.f32 %v1499, %v1534
      %v1537 = vadd.f32 %v1500, %v1534
      %v1538 = vadd.f32 %v1501, %v1534
      %v1539 = vadd.f32 %v1502, %v1534
      %v1540 = vadd.f32 %v1503, %v1534
      %v1541 = vadd.f32 %v1504, %v1534
      %v1542 = vadd.f32 %v1505, %v1534
      %v1543 = vadd.f32 %v1506, %v1534
      %v1544 = vadd.f32 %v1507, %v1534
      %v1545 = vadd.f32 %v1508, %v1534
      %v1546 = vadd.f32 %v1509, %v1534
      %v1547 = vadd.f32 %v1510, %v1534
      %v1548 = vadd.f32 %v1511, %v1534
      %v1549 = vadd.f32 %v1512, %v1534
      %v1550 = vadd.f32 %v1513, %v1534
      %v1551 = vadd.f32 %v1514, %v1534
      %v1552 = vadd.f32 %v1515, %v1534
      %v1553 = vadd.f32 %v1516, %v1534
      %v1554 = vadd.f32 %v1517, %v1534
      %v1555 = vadd.f32 %v1518, %v1534
      %v1556 = vadd.f32 %v1519, %v1534
      %v1557 = vadd.f32 %v1520, %v1534
      %v1558 = vadd.f32 %v1521, %v1534
      %v1559 = vadd.f32 %v1522, %v1534
      %v1560 = vadd.f32 %v1523, %v1534
      %v1561 = vadd.f32 %v1524, %v1534
      %v1562 = vadd.f32 %v1525, %v1534
      %v1563 = vadd.f32 %v1526, %v1534
      %v1564 = vadd.f32 %v1527, %v1534
      %v1565 = vadd.f32 %v1528, %v1534
      %v1566 = vadd.f32 %v1529, %v1534
      %v1567 = vmax.f32 %v1535, 0.0
      %v1568 = vmax.f32 %v1536, 0.0
      %v1569 = vmax.f32 %v1537, 0.0
      %v1570 = vmax.f32 %v1538, 0.0
      %v1571 = vmax.f32 %v1539, 0.0
      %v1572 = vmax.f32 %v1540, 0.0
      %v1573 = vmax.f32 %v1541, 0.0
      %v1574 = vmax.f32 %v1542, 0.0
      %v1575 = vmax.f32 %v1543, 0.0
      %v1576 = vmax.f32 %v1544, 0.0
      %v1577 = vmax.f32 %v1545, 0.0
      %v1578 = vmax.f32 %v1546, 0.0
      %v1579 = vmax.f32 %v1547, 0.0
      %v1580 = vmax.f32 %v1548, 0.0
      %v1581 = vmax.f32 %v1549, 0.0
      %v1582 = vmax.f32 %v1550, 0.0
      %v1583 = vmax.f32 %v1551, 0.0
      %v1584 = vmax.f32 %v1552, 0.0
      %v1585 = vmax.f32 %v1553, 0.0
      %v1586 = vmax.f32 %v1554, 0.0
      %v1587 = vmax.f32 %v1555, 0.0
      %v1588 = vmax.f32 %v1556, 0.0
      %v1589 = vmax.f32 %v1557, 0.0
      %v1590 = vmax.f32 %v1558, 0.0
      %v1591 = vmax.f32 %v1559, 0.0
      %v1592 = vmax.f32 %v1560, 0.0
      %v1593 = vmax.f32 %v1561, 0.0
      %v1594 = vmax.f32 %v1562, 0.0
      %v1595 = vmax.f32 %v1563, 0.0
      %v1596 = vmax.f32 %v1564, 0.0
      %v1597 = vmax.f32 %v1565, 0.0
      %v1598 = vmax.f32 %v1566, 0.0
      %v1599 = vpack.c.bf16 %v1568, %v1567
      %v1600 = vpack.c.bf16 %v1570, %v1569
      %v1601 = vpack.c.bf16 %v1572, %v1571
      %v1602 = vpack.c.bf16 %v1574, %v1573
      %v1603 = vpack.c.bf16 %v1576, %v1575
      %v1604 = vpack.c.bf16 %v1578, %v1577
      %v1605 = vpack.c.bf16 %v1580, %v1579
      %v1606 = vpack.c.bf16 %v1582, %v1581
      %v1607 = vpack.c.bf16 %v1584, %v1583
      %v1608 = vpack.c.bf16 %v1586, %v1585
      %v1609 = vpack.c.bf16 %v1588, %v1587
      %v1610 = vpack.c.bf16 %v1590, %v1589
      %v1611 = vpack.c.bf16 %v1592, %v1591
      %v1612 = vpack.c.bf16 %v1594, %v1593
      %v1613 = vpack.c.bf16 %v1596, %v1595
      %v1614 = vpack.c.bf16 %v1598, %v1597
      %v1615 = vld [vmem:[%s3] sm:$0x3]
      %vm1616 = vcmask 31744
      %v1618 = vsel %vm1616, %v1599, 0
      %v1621 = vsel %vm1616, %v1600, 0
      %v1624 = vsel %vm1616, %v1601, 0
      %v1627 = vsel %vm1616, %v1602, 0
      %v1630 = vsel %vm1616, %v1603, 0
      %v1633 = vsel %vm1616, %v1604, 0
      %v1636 = vsel %vm1616, %v1605, 0
      %v1639 = vsel %vm1616, %v1606, 0
      %v1642 = vsel %vm1616, %v1607, 0
      %v1645 = vsel %vm1616, %v1608, 0
      %v1648 = vsel %vm1616, %v1609, 0
      %v1651 = vsel %vm1616, %v1610, 0
      %v1654 = vsel %vm1616, %v1611, 0
      %v1657 = vsel %vm1616, %v1612, 0
      %v1660 = vsel %vm1616, %v1613, 0
      %v1663 = vsel %vm1616, %v1614, 0
      %vm1665 = vcmask 1041408
      %v1667 = vsel %vm1665, %v1615, 0
      %1669 = vmatprep.subr.bf16.mxu0 0
      %1670 = vmatpush1.bf16.msra.mxu0 %v1667
      %1671 = vmatprep.subr.bf16.mxu0 0
      %1672 = vmatpush1.bf16.msra.mxu0 0
      %1673 = vmatprep.subr.bf16.mxu0 0
      %1674 = vmatpush1.bf16.msra.mxu0 0
      %1675 = vmatprep.subr.bf16.mxu0 0
      %1676 = vmatpush1.bf16.msra.mxu0 0
      %1677 = vmatprep.subr.bf16.mxu0 0
      %1678 = vmatpush1.bf16.msra.mxu0 0
      %1679 = vmatprep.subr.bf16.mxu0 0
      %1680 = vmatpush1.bf16.msra.mxu0 0
      %1681 = vmatprep.subr.bf16.mxu0 0
      %1682 = vmatpush1.bf16.msra.mxu0 0
      %1683 = vmatprep.subr.bf16.mxu0 0
      %1684 = vmatpush1.bf16.msra.mxu0 0
      %1685 = vmatprep.subr.bf16.mxu0 0
      %1686 = vmatpush1.bf16.msra.mxu0 0
      %1687 = vmatprep.subr.bf16.mxu0 0
      %1688 = vmatpush1.bf16.msra.mxu0 0
      %1689 = vmatprep.subr.bf16.mxu0 0
      %1690 = vmatpush1.bf16.msra.mxu0 0
      %1691 = vmatprep.subr.bf16.mxu0 0
      %1692 = vmatpush1.bf16.msra.mxu0 0
      %1693 = vmatprep.subr.bf16.mxu0 0
      %1694 = vmatpush1.bf16.msra.mxu0 0
      %1695 = vmatprep.subr.bf16.mxu0 0
      %1696 = vmatpush1.bf16.msra.mxu0 0
      %1697 = vmatprep.subr.bf16.mxu0 0
      %1698 = vmatpush1.bf16.msra.mxu0 0
      %1699 = vmatprep.subr.bf16.mxu0 0
      %1700 = vmatpush1.bf16.msra.mxu0 0
      %1701 = vmatprep.mubr.bf16.mxu0 0
      %1702 = vmatmul.mubr.bf16.gmra.mrb[0].mxu0 %v1618
      %v1703 = vpop.f32.mrb[0].mxu0
      %v1704 = vadd.f32 0.0, %v1703
      %v1705 = vpop.f32.mrb[0].mxu0
      %v1706 = vpop.f32.mrb[0].mxu0
      %v1707 = vadd.f32 0.0, %v1706
      %v1708 = vpop.f32.mrb[0].mxu0
      %1709 = vmatprep.mubr.bf16.mxu0 0
      %1710 = vmatmul.mubr.bf16.gmra.mrb[0].mxu0 %v1621
      %v1711 = vpop.f32.mrb[0].mxu0
      %v1712 = vadd.f32 0.0, %v1711
      %v1713 = vpop.f32.mrb[0].mxu0
      %v1714 = vpop.f32.mrb[0].mxu0
      %v1715 = vadd.f32 0.0, %v1714
      %v1716 = vpop.f32.mrb[0].mxu0
      %1717 = vmatprep.mubr.bf16.mxu0 0
      %1718 = vmatmul.mubr.bf16.gmra.mrb[0].mxu0 %v1624
      %v1719 = vpop.f32.mrb[0].mxu0
      %v1720 = vadd.f32 0.0, %v1719
      %v1721 = vpop.f32.mrb[0].mxu0
      %v1722 = vpop.f32.mrb[0].mxu0
      %v1723 = vadd.f32 0.0, %v1722
      %v1724 = vpop.f32.mrb[0].mxu0
      %1725 = vmatprep.mubr.bf16.mxu0 0
      %1726 = vmatmul.mubr.bf16.gmra.mrb[0].mxu0 %v1627
      %v1727 = vpop.f32.mrb[0].mxu0
      %v1728 = vadd.f32 0.0, %v1727
      %v1729 = vpop.f32.mrb[0].mxu0
      %v1730 = vpop.f32.mrb[0].mxu0
      %v1731 = vadd.f32 0.0, %v1730
      %v1732 = vpop.f32.mrb[0].mxu0
      %1733 = vmatprep.mubr.bf16.mxu0 0
      %1734 = vmatmul.mubr.bf16.gmra.mrb[0].mxu0 %v1630
      %v1735 = vpop.f32.mrb[0].mxu0
      %v1736 = vadd.f32 0.0, %v1735
      %v1737 = vpop.f32.mrb[0].mxu0
      %v1738 = vpop.f32.mrb[0].mxu0
      %v1739 = vadd.f32 0.0, %v1738
      %v1740 = vpop.f32.mrb[0].mxu0
      %1741 = vmatprep.mubr.bf16.mxu0 0
      %1742 = vmatmul.mubr.bf16.gmra.mrb[0].mxu0 %v1633
      %v1743 = vpop.f32.mrb[0].mxu0
      %v1744 = vadd.f32 0.0, %v1743
      %v1745 = vpop.f32.mrb[0].mxu0
      %v1746 = vpop.f32.mrb[0].mxu0
      %v1747 = vadd.f32 0.0, %v1746
      %v1748 = vpop.f32.mrb[0].mxu0
      %1749 = vmatprep.mubr.bf16.mxu0 0
      %1750 = vmatmul.mubr.bf16.gmra.mrb[0].mxu0 %v1636
      %v1751 = vpop.f32.mrb[0].mxu0
      %v1752 = vadd.f32 0.0, %v1751
      %v1753 = vpop.f32.mrb[0].mxu0
      %v1754 = vpop.f32.mrb[0].mxu0
      %v1755 = vadd.f32 0.0, %v1754
      %v1756 = vpop.f32.mrb[0].mxu0
      %1757 = vmatprep.mubr.bf16.mxu0 0
      %1758 = vmatmul.mubr.bf16.gmra.mrb[0].mxu0 %v1639
      %v1759 = vpop.f32.mrb[0].mxu0
      %v1760 = vadd.f32 0.0, %v1759
      %v1761 = vpop.f32.mrb[0].mxu0
      %v1762 = vpop.f32.mrb[0].mxu0
      %v1763 = vadd.f32 0.0, %v1762
      %v1764 = vpop.f32.mrb[0].mxu0
      %1765 = vmatprep.mubr.bf16.mxu0 0
      %1766 = vmatmul.mubr.bf16.gmra.mrb[0].mxu0 %v1642
      %v1767 = vpop.f32.mrb[0].mxu0
      %v1768 = vadd.f32 0.0, %v1767
      %v1769 = vpop.f32.mrb[0].mxu0
      %v1770 = vpop.f32.mrb[0].mxu0
      %v1771 = vadd.f32 0.0, %v1770
      %v1772 = vpop.f32.mrb[0].mxu0
      %1773 = vmatprep.mubr.bf16.mxu0 0
      %1774 = vmatmul.mubr.bf16.gmra.mrb[0].mxu0 %v1645
      %v1775 = vpop.f32.mrb[0].mxu0
      %v1776 = vadd.f32 0.0, %v1775
      %v1777 = vpop.f32.mrb[0].mxu0
      %v1778 = vpop.f32.mrb[0].mxu0
      %v1779 = vadd.f32 0.0, %v1778
      %v1780 = vpop.f32.mrb[0].mxu0
      %1781 = vmatprep.mubr.bf16.mxu0 0
      %1782 = vmatmul.mubr.bf16.gmra.mrb[0].mxu0 %v1648
      %v1783 = vpop.f32.mrb[0].mxu0
      %v1784 = vadd.f32 0.0, %v1783
      %v1785 = vpop.f32.mrb[0].mxu0
      %v1786 = vpop.f32.mrb[0].mxu0
      %v1787 = vadd.f32 0.0, %v1786
      %v1788 = vpop.f32.mrb[0].mxu0
      %1789 = vmatprep.mubr.bf16.mxu0 0
      %1790 = vmatmul.mubr.bf16.gmra.mrb[0].mxu0 %v1651
      %v1791 = vpop.f32.mrb[0].mxu0
      %v1792 = vadd.f32 0.0, %v1791
      %v1793 = vpop.f32.mrb[0].mxu0
      %v1794 = vpop.f32.mrb[0].mxu0
      %v1795 = vadd.f32 0.0, %v1794
      %v1796 = vpop.f32.mrb[0].mxu0
      %1797 = vmatprep.mubr.bf16.mxu0 0
      %1798 = vmatmul.mubr.bf16.gmra.mrb[0].mxu0 %v1654
      %v1799 = vpop.f32.mrb[0].mxu0
      %v1800 = vadd.f32 0.0, %v1799
      %v1801 = vpop.f32.mrb[0].mxu0
      %v1802 = vpop.f32.mrb[0].mxu0
      %v1803 = vadd.f32 0.0, %v1802
      %v1804 = vpop.f32.mrb[0].mxu0
      %1805 = vmatprep.mubr.bf16.mxu0 0
      %1806 = vmatmul.mubr.bf16.gmra.mrb[0].mxu0 %v1657
      %v1807 = vpop.f32.mrb[0].mxu0
      %v1808 = vadd.f32 0.0, %v1807
      %v1809 = vpop.f32.mrb[0].mxu0
      %v1810 = vpop.f32.mrb[0].mxu0
      %v1811 = vadd.f32 0.0, %v1810
      %v1812 = vpop.f32.mrb[0].mxu0
      %1813 = vmatprep.mubr.bf16.mxu0 0
      %1814 = vmatmul.mubr.bf16.gmra.mrb[0].mxu0 %v1660
      %v1815 = vpop.f32.mrb[0].mxu0
      %v1816 = vadd.f32 0.0, %v1815
      %v1817 = vpop.f32.mrb[0].mxu0
      %v1818 = vpop.f32.mrb[0].mxu0
      %v1819 = vadd.f32 0.0, %v1818
      %v1820 = vpop.f32.mrb[0].mxu0
      %1821 = vmatprep.mubr.bf16.mxu0 0
      %1822 = vmatmul.mubr.bf16.gmra.mrb[0].mxu0 %v1663
      %v1823 = vpop.f32.mrb[0].mxu0
      %v1824 = vadd.f32 0.0, %v1823
      %v1825 = vpop.f32.mrb[0].mxu0
      %v1826 = vpop.f32.mrb[0].mxu0
      %v1827 = vadd.f32 0.0, %v1826
      %v1828 = vpop.f32.mrb[0].mxu0
      %1829 = vdwg.mxu0
      %v1830 = vld [vmem:[%s4] sm:$0x1]
      %v1831 = vlaneseq
      %v1832 = vshrl.u32 %v1831, 7
      %v1833 = vsub.s32 0, %v1832
      %v1834 = vrot.slane %v1830, %v1833
      %v1835 = vmul.f32 %v1704, %v1834
      %v1836 = vmul.f32 %v1707, %v1834
      %v1837 = vmul.f32 %v1712, %v1834
      %v1838 = vmul.f32 %v1715, %v1834
      %v1839 = vmul.f32 %v1720, %v1834
      %v1840 = vmul.f32 %v1723, %v1834
      %v1841 = vmul.f32 %v1728, %v1834
      %v1842 = vmul.f32 %v1731, %v1834
      %v1843 = vmul.f32 %v1736, %v1834
      %v1844 = vmul.f32 %v1739, %v1834
      %v1845 = vmul.f32 %v1744, %v1834
      %v1846 = vmul.f32 %v1747, %v1834
      %v1847 = vmul.f32 %v1752, %v1834
      %v1848 = vmul.f32 %v1755, %v1834
      %v1849 = vmul.f32 %v1760, %v1834
      %v1850 = vmul.f32 %v1763, %v1834
      %v1851 = vmul.f32 %v1768, %v1834
      %v1852 = vmul.f32 %v1771, %v1834
      %v1853 = vmul.f32 %v1776, %v1834
      %v1854 = vmul.f32 %v1779, %v1834
      %v1855 = vmul.f32 %v1784, %v1834
      %v1856 = vmul.f32 %v1787, %v1834
      %v1857 = vmul.f32 %v1792, %v1834
      %v1858 = vmul.f32 %v1795, %v1834
      %v1859 = vmul.f32 %v1800, %v1834
      %v1860 = vmul.f32 %v1803, %v1834
      %v1861 = vmul.f32 %v1808, %v1834
      %v1862 = vmul.f32 %v1811, %v1834
      %v1863 = vmul.f32 %v1816, %v1834
      %v1864 = vmul.f32 %v1819, %v1834
      %v1865 = vmul.f32 %v1824, %v1834
      %v1866 = vmul.f32 %v1827, %v1834
      %v1867 = vld [vmem:[%s4 + $0x1] sm:$0x1]
      %v1868 = vlaneseq
      %v1869 = vshrl.u32 %v1868, 7
      %v1870 = vsub.s32 0, %v1869
      %v1871 = vrot.slane %v1867, %v1870
      %v1872 = vadd.f32 %v1835, %v1871
      %v1873 = vadd.f32 %v1836, %v1871
      %v1874 = vadd.f32 %v1837, %v1871
      %v1875 = vadd.f32 %v1838, %v1871
      %v1876 = vadd.f32 %v1839, %v1871
      %v1877 = vadd.f32 %v1840, %v1871
      %v1878 = vadd.f32 %v1841, %v1871
      %v1879 = vadd.f32 %v1842, %v1871
      %v1880 = vadd.f32 %v1843, %v1871
      %v1881 = vadd.f32 %v1844, %v1871
      %v1882 = vadd.f32 %v1845, %v1871
      %v1883 = vadd.f32 %v1846, %v1871
      %v1884 = vadd.f32 %v1847, %v1871
      %v1885 = vadd.f32 %v1848, %v1871
      %v1886 = vadd.f32 %v1849, %v1871
      %v1887 = vadd.f32 %v1850, %v1871
      %v1888 = vadd.f32 %v1851, %v1871
      %v1889 = vadd.f32 %v1852, %v1871
      %v1890 = vadd.f32 %v1853, %v1871
      %v1891 = vadd.f32 %v1854, %v1871
      %v1892 = vadd.f32 %v1855, %v1871
      %v1893 = vadd.f32 %v1856, %v1871
      %v1894 = vadd.f32 %v1857, %v1871
      %v1895 = vadd.f32 %v1858, %v1871
      %v1896 = vadd.f32 %v1859, %v1871
      %v1897 = vadd.f32 %v1860, %v1871
      %v1898 = vadd.f32 %v1861, %v1871
      %v1899 = vadd.f32 %v1862, %v1871
      %v1900 = vadd.f32 %v1863, %v1871
      %v1901 = vadd.f32 %v1864, %v1871
      %v1902 = vadd.f32 %v1865, %v1871
      %v1903 = vadd.f32 %v1866, %v1871
      %v1904 = vmax.f32 %v1872, 0.0
      %v1905 = vmax.f32 %v1873, 0.0
      %v1906 = vmax.f32 %v1874, 0.0
      %v1907 = vmax.f32 %v1875, 0.0
      %v1908 = vmax.f32 %v1876, 0.0
      %v1909 = vmax.f32 %v1877, 0.0
      %v1910 = vmax.f32 %v1878, 0.0
      %v1911 = vmax.f32 %v1879, 0.0
      %v1912 = vmax.f32 %v1880, 0.0
      %v1913 = vmax.f32 %v1881, 0.0
      %v1914 = vmax.f32 %v1882, 0.0
      %v1915 = vmax.f32 %v1883, 0.0
      %v1916 = vmax.f32 %v1884, 0.0
      %v1917 = vmax.f32 %v1885, 0.0
      %v1918 = vmax.f32 %v1886, 0.0
      %v1919 = vmax.f32 %v1887, 0.0
      %v1920 = vmax.f32 %v1888, 0.0
      %v1921 = vmax.f32 %v1889, 0.0
      %v1922 = vmax.f32 %v1890, 0.0
      %v1923 = vmax.f32 %v1891, 0.0
      %v1924 = vmax.f32 %v1892, 0.0
      %v1925 = vmax.f32 %v1893, 0.0
      %v1926 = vmax.f32 %v1894, 0.0
      %v1927 = vmax.f32 %v1895, 0.0
      %v1928 = vmax.f32 %v1896, 0.0
      %v1929 = vmax.f32 %v1897, 0.0
      %v1930 = vmax.f32 %v1898, 0.0
      %v1931 = vmax.f32 %v1899, 0.0
      %v1932 = vmax.f32 %v1900, 0.0
      %v1933 = vmax.f32 %v1901, 0.0
      %v1934 = vmax.f32 %v1902, 0.0
      %v1935 = vmax.f32 %v1903, 0.0
      %vm1936 = vcmask 64512
      %1937 = vst.msk [vmem:[%s255] sm:$0xff] %vm1936, %v1904
      %1938 = vst.msk [vmem:[%s255 + $0x8] sm:$0xff] %vm1936, %v1905
      %1939 = vst.msk [vmem:[%s255 + $0x10] sm:$0xff] %vm1936, %v1906
      %1940 = vst.msk [vmem:[%s255 + $0x18] sm:$0xff] %vm1936, %v1907
      %1941 = vst.msk [vmem:[%s255 + $0x20] sm:$0xff] %vm1936, %v1908
      %1942 = vst.msk [vmem:[%s255 + $0x28] sm:$0xff] %vm1936, %v1909
      %1943 = vst.msk [vmem:[%s255 + $0x30] sm:$0xff] %vm1936, %v1910
      %1944 = vst.msk [vmem:[%s255 + $0x38] sm:$0xff] %vm1936, %v1911
      %1945 = vst.msk [vmem:[%s255 + $0x40] sm:$0xff] %vm1936, %v1912
      %1946 = vst.msk [vmem:[%s255 + $0x48] sm:$0xff] %vm1936, %v1913
      %1947 = vst.msk [vmem:[%s255 + $0x50] sm:$0xff] %vm1936, %v1914
      %1948 = vst.msk [vmem:[%s255 + $0x58] sm:$0xff] %vm1936, %v1915
      %1949 = vst.msk [vmem:[%s255 + $0x60] sm:$0xff] %vm1936, %v1916
      %1950 = vst.msk [vmem:[%s255 + $0x68] sm:$0xff] %vm1936, %v1917
      %1951 = vst.msk [vmem:[%s255 + $0x70] sm:$0xff] %vm1936, %v1918
      %1952 = vst.msk [vmem:[%s255 + $0x78] sm:$0xff] %vm1936, %v1919
      %1953 = vst.msk [vmem:[%s255 + $0x80] sm:$0xff] %vm1936, %v1920
      %1954 = vst.msk [vmem:[%s255 + $0x88] sm:$0xff] %vm1936, %v1921
      %1955 = vst.msk [vmem:[%s255 + $0x90] sm:$0xff] %vm1936, %v1922
      %1956 = vst.msk [vmem:[%s255 + $0x98] sm:$0xff] %vm1936, %v1923
      %1957 = vst.msk [vmem:[%s255 + $0xa0] sm:$0xff] %vm1936, %v1924
      %1958 = vst.msk [vmem:[%s255 + $0xa8] sm:$0xff] %vm1936, %v1925
      %1959 = vst.msk [vmem:[%s255 + $0xb0] sm:$0xff] %vm1936, %v1926
      %1960 = vst.msk [vmem:[%s255 + $0xb8] sm:$0xff] %vm1936, %v1927
      %1961 = vst.msk [vmem:[%s255 + $0xc0] sm:$0xff] %vm1936, %v1928
      %1962 = vst.msk [vmem:[%s255 + $0xc8] sm:$0xff] %vm1936, %v1929
      %1963 = vst.msk [vmem:[%s255 + $0xd0] sm:$0xff] %vm1936, %v1930
      %1964 = vst.msk [vmem:[%s255 + $0xd8] sm:$0xff] %vm1936, %v1931
      %1965 = vst.msk [vmem:[%s255 + $0xe0] sm:$0xff] %vm1936, %v1932
      %1966 = vst.msk [vmem:[%s255 + $0xe8] sm:$0xff] %vm1936, %v1933
      %1967 = vst.msk [vmem:[%s255 + $0xf0] sm:$0xff] %vm1936, %v1934
      %1968 = vst.msk [vmem:[%s255 + $0xf8] sm:$0xff] %vm1936, %v1935
      %s1969 = smul.u32 16, %s21
      %p1970 = scmp.lt.s32.totalorder %s20, 1
      %s1971 = scalar_select %p1970, %s20, 1
      %p1972 = scmp.lt.s32.totalorder %s1969, 15
      %s1973 = scalar_select %p1972, %s1969, 15
      %s1974 = smul.addr %s1973, 2
      %s1975 = smul.addr %s1971, 32
      %s1976 = sadd.s32 %s1974, %s1975
      %s1977 = smul.addr %s1976, 8
      %s1978 = scalar_lea.vmem %s5, %s1977
      // Predicated region
      $region41: #{tpu_custom_call.1} parent=39 // pred_check
        %p1979 = pneg %p160
      $region42: #{tpu_custom_call.1} parent=39 // pred_check_branch
        %1981 = sbr.rel (%p1979) target = $region44
      $region43: #{tpu_custom_call.1} parent=39 // pred_region
        %s1982 = smul.u32 16, %s21
      $region44: #{tpu_custom_call.1} parent=39 // pred_fallthru
        _
    $region40: #{tpu_custom_call.1} parent=5 // pred_fallthru
      _
    %p1983 = scmp.le.s32.totalorder 2, %s11
    // Predicated region
    $region45: #{tpu_custom_call.1} parent=5 // pred_check
      %p1984 = pneg %p1983
    $region46: #{tpu_custom_call.1} parent=5 // pred_check_branch
      %1986 = sbr.rel (%p1984) target = $region48
    $region47: #{tpu_custom_call.1} parent=5 // pred_region
      %s1987 = ssub.s32 %s11, 2
      // Predicated region
      $region49: #{tpu_custom_call.1} parent=47 // pred_check
        %p1988 = pneg %p166
      $region50: #{tpu_custom_call.1} parent=47 // pred_check_branch
        %1990 = sbr.rel (%p1988) target = $region52
      $region51: #{tpu_custom_call.1} parent=47 // pred_region
        %s1991 = smul.u32 16, %s23
        %p1992 = scmp.lt.s32.totalorder %s22, 1
        %s1993 = scalar_select %p1992, %s22, 1
        %p1994 = scmp.lt.s32.totalorder %s1991, 15
        %s1995 = scalar_select %p1994, %s1991, 15
        %s1996 = smul.addr %s1995, 2
        %s1997 = smul.addr %s1993, 32
        %s1998 = sadd.s32 %s1996, %s1997
        %s1999 = smul.addr %s1998, 8
        %s2000 = scalar_lea.vmem %s5, %s1999
      $region52: #{tpu_custom_call.1} parent=47 // pred_fallthru
        _
    $region48: #{tpu_custom_call.1} parent=5 // pred_fallthru
      _
  $region6: #{tpu_custom_call.1} parent=0 // loop_footer
    %s15 = sadd.s32 1, %s11
  $region7: #{tpu_custom_call.1} parent=0 // loop_footer_branch
    %10 = sbr.rel target = $region3
  $region8: #{tpu_custom_call.1} parent=0 // loop_exit
    _

</llo_original>
